<compile_context>
chip_gen: v5e
topology: v5e:2x2
jax: 0.10.0
libtpu: 0.0.40
codegen_flags: <defaults>
</compile_context>

<pallas_src>
import functools

import jax
import jax.numpy as jnp
from jax.experimental import pallas as pl
from jax.experimental.pallas import tpu as pltpu


def _round_up(x, m):
    return ((x + m - 1) // m) * m


# ----------------------------------------------------------------------------
# Pallas kernels
#   p_ref : (Kp, TM)   bf16  im2col patches (K = KH*KW*Cin on sublanes, M on lanes)
#   w_ref : (Cout, Kp) bf16  folded weights
#   b_ref : (Cout, 1)  f32   bias
#   a_ref : (1,)       f32   PReLU scalar weight (SMEM)
#   r_ref : (Cout, TM) f32   residual branch (fused-add variant only)
#   o_ref : (Cout, TM) f32   conv(+act) output   (lane-dense: M on 128-lane axis)
#   s_ref : (Cout, TM) f32   conv(+act) + residual
# ----------------------------------------------------------------------------
def _conv_kernel(p_ref, w_ref, b_ref, a_ref, o_ref, *, apply_act):
    acc = jnp.dot(w_ref[...], p_ref[...], preferred_element_type=jnp.float32)
    acc = acc + b_ref[...]
    if apply_act:
        alpha = a_ref[0]
        acc = jnp.where(acc >= 0.0, acc, alpha * acc)   # PReLU (scalar weight)
    o_ref[...] = acc


def _conv_add_kernel(p_ref, w_ref, b_ref, a_ref, r_ref, o_ref, s_ref, *, apply_act):
    acc = jnp.dot(w_ref[...], p_ref[...], preferred_element_type=jnp.float32)
    acc = acc + b_ref[...]
    if apply_act:
        alpha = a_ref[0]
        acc = jnp.where(acc >= 0.0, acc, alpha * acc)
    o_ref[...] = acc                                    # subunit output (for output_list)
    s_ref[...] = acc + r_ref[...]                       # fused residual add


# ----------------------------------------------------------------------------
# Glue + pallas_call wrapper
# ----------------------------------------------------------------------------
def _im2col_T(x_nhwc, KH, KW, stride, padding):
    """im2col, transposed: returns (K, M) bf16 with K = KH*KW*Cin (tap-major,
    channel-minor — matches w.reshape(KH*KW*Cin, Cout)) and M = N*Ho*Wo."""
    N, H, W, Cin = x_nhwc.shape
    xp = jnp.pad(x_nhwc, ((0, 0), (padding, padding), (padding, padding), (0, 0)))
    xp = xp.astype(jnp.bfloat16)
    Ho = (H + 2 * padding - KH) // stride + 1
    Wo = (W + 2 * padding - KW) // stride + 1
    M = N * Ho * Wo
    taps = []
    for kh in range(KH):
        for kw in range(KW):
            sl = jax.lax.slice(
                xp,
                (0, kh, kw, 0),
                (N, kh + stride * (Ho - 1) + 1, kw + stride * (Wo - 1) + 1, Cin),
                (1, stride, stride, 1),
            )
            taps.append(sl.reshape(M, Cin))
    patches = jnp.concatenate(taps, axis=1)             # (M, K) tap-major/cin-minor
    # TODO(synk): the tap gather still round-trips ~K/Cin x the input through
    # XLA/HBM; an in-kernel gather from a pl.ANY ref would cut that traffic.
    return patches.T, (Ho, Wo, M)                       # (K, M)


def conv2d_prelu(x_nhwc, w, b, alpha, *, stride, padding, apply_act,
                 residual_nhwc=None):
    """Conv2d (dilation=1, groups=1) + bias + optional PReLU, optionally fused
    with a residual add (then returns (y, y + residual)).

    x_nhwc : (N, H, W, Cin) f32     w : (KH, KW, Cin, Cout)     b : (Cout,)
    """
    N, H, W, Cin = x_nhwc.shape
    KH, KW, _, Cout = w.shape
    patches_T, (Ho, Wo, M) = _im2col_T(x_nhwc, KH, KW, stride, padding)
    K = KH * KW * Cin

    # Pad K (sublane axis, bf16) to a multiple of 16 and M (lane axis) to the
    # tile size; padded columns are sliced away after the call.
    Kp = _round_up(K, 16)
    TM = min(512, _round_up(M, 128))
    Mp = _round_up(M, TM)
    patches_T = jnp.pad(patches_T, ((0, Kp - K), (0, Mp - M)))

    w_t = jnp.pad(w.reshape(K, Cout).astype(jnp.bfloat16), ((0, Kp - K), (0, 0))).T
    b2 = b.reshape(Cout, 1).astype(jnp.float32)
    a1 = jnp.asarray([alpha], dtype=jnp.float32)

    grid = (Mp // TM,)
    p_spec = pl.BlockSpec((Kp, TM), lambda i: (0, i))
    w_spec = pl.BlockSpec((Cout, Kp), lambda i: (0, 0))
    b_spec = pl.BlockSpec((Cout, 1), lambda i: (0, 0))
    a_spec = pl.BlockSpec(memory_space=pltpu.MemorySpace.SMEM)
    o_spec = pl.BlockSpec((Cout, TM), lambda i: (0, i))
    cparams = pltpu.CompilerParams(
        dimension_semantics=("parallel",),               # megacore split on v7x
        vmem_limit_bytes=32 * 1024 * 1024,               # safe on v5e/v6e/v7x
    )

    if residual_nhwc is None:
        out_t = pl.pallas_call(
            functools.partial(_conv_kernel, apply_act=apply_act),
            out_shape=jax.ShapeDtypeStruct((Cout, Mp), jnp.float32),
            grid=grid,
            in_specs=[p_spec, w_spec, b_spec, a_spec],
            out_specs=o_spec,
            compiler_params=cparams,
        )(patches_T, w_t, b2, a1)
        return out_t[:, :M].T.reshape(N, Ho, Wo, Cout)

    r_t = jnp.pad(residual_nhwc.reshape(M, Cout).T.astype(jnp.float32),
                  ((0, 0), (0, Mp - M)))
    out_t, sum_t = pl.pallas_call(
        functools.partial(_conv_add_kernel, apply_act=apply_act),
        out_shape=(jax.ShapeDtypeStruct((Cout, Mp), jnp.float32),
                   jax.ShapeDtypeStruct((Cout, Mp), jnp.float32)),
        grid=grid,
        in_specs=[p_spec, w_spec, b_spec, a_spec, o_spec],
        out_specs=(o_spec, o_spec),
        compiler_params=cparams,
    )(patches_T, w_t, b2, a1, r_t)
    y = out_t[:, :M].T.reshape(N, Ho, Wo, Cout)
    ysum = sum_t[:, :M].T.reshape(N, Ho, Wo, Cout)
    return y, ysum


# ----------------------------------------------------------------------------
# Parameter construction (deterministic, in-script)
# ----------------------------------------------------------------------------
def _init_conv(key, cin, cout, k):
    kw_key, kb_key = jax.random.split(key)
    w = jax.random.normal(kw_key, (k, k, cin, cout), jnp.float32) * 0.05
    b = jax.random.normal(kb_key, (cout,), jnp.float32) * 0.01
    return w, b


def init_residual_unit(key, cin, cout, stride, kernel_size, subunits):
    keys = jax.random.split(key, subunits + 1)
    pad = (kernel_size - 1) // 2                          # same_padding(k, dilation=1)
    subs = []
    sch, sstr = cin, stride
    for su in range(subunits):
        w, b = _init_conv(keys[su], sch, cout, kernel_size)
        # ADN with norm=None, dropout=0 -> just PReLU (scalar weight, init 0.25)
        subs.append(dict(w=w, b=b, alpha=0.25, stride=sstr, padding=pad))
        sch, sstr = cout, 1
    residual = None
    if stride != 1 or cin != cout:
        rk, rp = kernel_size, pad
        if stride == 1:
            rk, rp = 1, 0
        rw, rb = _init_conv(keys[-1], cin, cout, rk)
        residual = dict(w=rw, b=rb, stride=stride, padding=rp)
    return dict(subunits=subs, residual=residual)


def init_encoder(key, in_channels, channels, strides, kernel_size, num_res_units):
    keys = jax.random.split(key, len(channels))
    layers = []
    for i in range(len(channels)):
        cin = in_channels if i == 0 else channels[i - 1]
        # Reference: last layer's stride is forced to 2 regardless of strides[-1].
        s = strides[i] if i < len(channels) - 1 else 2
        layers.append(init_residual_unit(keys[i], cin, channels[i], s,
                                         kernel_size, max(1, num_res_units)))
    return layers


# ----------------------------------------------------------------------------
# Forward passes
# ----------------------------------------------------------------------------
def residual_unit_forward(params, x_nhwc, ratio):
    # residual branch: plain conv (no activation), or identity
    if params["residual"] is None:
        res = x_nhwc
    else:
        r = params["residual"]
        res = conv2d_prelu(x_nhwc, r["w"], r["b"], 0.0,
                           stride=r["stride"], padding=r["padding"],
                           apply_act=False)

    outs = []
    x = x_nhwc
    subs = params["subunits"]
    for idx, sp in enumerate(subs):
        if idx == len(subs) - 1:
            # fuse the residual add into the last subunit's kernel
            x, output = conv2d_prelu(x, sp["w"], sp["b"], sp["alpha"],
                                     stride=sp["stride"], padding=sp["padding"],
                                     apply_act=True, residual_nhwc=res)
        else:
            x = conv2d_prelu(x, sp["w"], sp["b"], sp["alpha"],
                             stride=sp["stride"], padding=sp["padding"],
                             apply_act=True)
        outs.append(x)

    # TODO(synk): pad_tensor_list_equal source unavailable; all subunit outputs
    # share one shape here, so combine=2 reduces to a plain stack along dim 0.
    stacked = jnp.stack(outs, axis=0)                     # (subunits, N, H, W, C)
    keep_len = round(stacked.shape[0] * ratio)            # same rounding as reference
    if ratio > 0:
        stacked = stacked[:keep_len]
    else:
        stacked = stacked[-keep_len:]                     # matches reference semantics

    return output, stacked


def encoder_forward(layer_params, x_nchw, ratio=1.0):
    """Matches EncoderMonaiCLstm.forward: returns [layer_features, child_features]."""
    x = jnp.transpose(x_nchw, (0, 2, 3, 1))               # NCHW -> NHWC (internal)
    layer_features = [[jnp.asarray(1)]]                   # mirrors [[torch.tensor(1)]]
    child_features = []
    for params in layer_params:
        x, child = residual_unit_forward(params, x, ratio)
        layer_features.append(jnp.transpose(x, (0, 3, 1, 2)))          # back to NCHW
        child_features.append(jnp.transpose(child, (0, 1, 4, 2, 3)))   # (S,N,C,H,W)
    child_features = [[jnp.asarray(1)]] + child_features
    return [layer_features, child_features]


# ----------------------------------------------------------------------------
if __name__ == "__main__":
    key = jax.random.PRNGKey(0)
    pkey, xkey = jax.random.split(key)

    # EncoderMonaiCLstm(backbone, dimensions=2, in_channels=4, out_channels=...,
    #                   channels=(8,16,32), strides=(2,2,2), kernel_size=3,
    #                   num_res_units=3, act='PRELU', norm=None, dropout=0, ratio=1)
    in_channels = 4
    channels = (8, 16, 32)
    strides = (2, 2, 2)

    layer_params = init_encoder(pkey, in_channels, channels, strides,
                                kernel_size=3, num_res_units=3)

    x = jax.random.normal(xkey, (2, in_channels, 16, 16), jnp.float32)  # NCHW

    fwd = jax.jit(lambda xin: encoder_forward(layer_params, xin, ratio=1.0))
    out = fwd(x)

    for leaf in jax.tree_util.tree_leaves(out):
        jax.block_until_ready(leaf)

    print("KERNEL_OK")
</pallas_src>

<mosaic_0001>
module attributes {stable_mosaic.version = 11 : i64} {
  func.func @_conv_kernel(%arg0: i32, %arg1: memref<48x128xbf16, #tpu.memory_space<vmem>>, %arg2: memref<8x48xbf16, #tpu.memory_space<vmem>>, %arg3: memref<8x1xf32, #tpu.memory_space<vmem>>, %arg4: memref<1xf32, #tpu.memory_space<smem>>, %arg5: memref<8x128xf32, #tpu.memory_space<vmem>>) attributes {dimension_semantics = [#tpu.dimension_semantics<parallel>], iteration_bounds = array<i64: 1>, scalar_prefetch = 0 : i64, scratch_operands = 0 : i64, tpu.core_type = #tpu.core_type<tc>, window_params = [{transform_indices = @transform_0, window_bounds = array<i64: 48, 128>}, {pipeline_mode = #tpu.pipeline_mode<synchronous>, transform_indices = @transform_1, window_bounds = array<i64: 8, 48>}, {pipeline_mode = #tpu.pipeline_mode<synchronous>, transform_indices = @transform_2, window_bounds = array<i64: 8, 1>}, {transform_indices = @transform_3, window_bounds = array<i64: 1>}, {transform_indices = @transform_4, window_bounds = array<i64: 8, 128>}]} {
    %c0 = arith.constant 0 : index
    %c0_0 = arith.constant 0 : index
    %0 = vector.load %arg2[%c0, %c0_0] : memref<8x48xbf16, #tpu.memory_space<vmem>>, vector<8x48xbf16>
    %c0_1 = arith.constant 0 : index
    %c0_2 = arith.constant 0 : index
    %1 = vector.load %arg1[%c0_1, %c0_2] : memref<48x128xbf16, #tpu.memory_space<vmem>>, vector<48x128xbf16>
    %cst = arith.constant dense<0.000000e+00> : vector<8x128xf32>
    %2 = tpu.matmul %0, %1, %cst {dimension_numbers = #tpu.dot_dimension_numbers<[1], [0], [0], [1], [0, 0, 1, 1], [], []>} : vector<8x48xbf16>, vector<48x128xbf16>, vector<8x128xf32> -> vector<8x128xf32>
    %c0_3 = arith.constant 0 : index
    %c0_4 = arith.constant 0 : index
    %3 = vector.load %arg3[%c0_3, %c0_4] : memref<8x1xf32, #tpu.memory_space<vmem>>, vector<8x1xf32>
    %4 = vector.broadcast %3 : vector<8x1xf32> to vector<8x128xf32>
    %5 = arith.addf %2, %4 : vector<8x128xf32>
    %c0_5 = arith.constant 0 : index
    %6 = memref.load %arg4[%c0_5] : memref<1xf32, #tpu.memory_space<smem>>
    %cst_6 = arith.constant 0.000000e+00 : f32
    %7 = vector.broadcast %cst_6 : f32 to vector<8x128xf32>
    %8 = arith.cmpf oge, %5, %7 : vector<8x128xf32>
    %9 = vector.broadcast %6 : f32 to vector<8x128xf32>
    %10 = arith.mulf %9, %5 : vector<8x128xf32>
    %11 = arith.select %8, %5, %10 : vector<8x128xi1>, vector<8x128xf32>
    %c0_7 = arith.constant 0 : index
    %c0_8 = arith.constant 0 : index
    %12 = vector.load %arg5[%c0_7, %c0_8] : memref<8x128xf32, #tpu.memory_space<vmem>>, vector<8x128xf32>
    tpu.vector_store %arg5[%c0_7, %c0_8], %11 {strides = array<i32>} : memref<8x128xf32, #tpu.memory_space<vmem>>, vector<8x128xf32>,
    return
  }
  func.func @transform_0(%arg0: i32) -> (i32, i32) {
    %c0_i32 = arith.constant 0 : i32
    %c0_i32_0 = arith.constant 0 : i32
    return %c0_i32, %arg0 : i32, i32
  }
  func.func @transform_1(%arg0: i32) -> (i32, i32) {
    %c0_i32 = arith.constant 0 : i32
    %c0_i32_0 = arith.constant 0 : i32
    %c0_i32_1 = arith.constant 0 : i32
    return %c0_i32, %c0_i32_0 : i32, i32
  }
  func.func @transform_2(%arg0: i32) -> (i32, i32) {
    %c0_i32 = arith.constant 0 : i32
    %c0_i32_0 = arith.constant 0 : i32
    %c0_i32_1 = arith.constant 0 : i32
    return %c0_i32, %c0_i32_0 : i32, i32
  }
  func.func @transform_3(%arg0: i32) -> i32 {
    %c0_i32 = arith.constant 0 : i32
    %c0_i32_0 = arith.constant 0 : i32
    return %c0_i32 : i32
  }
  func.func @transform_4(%arg0: i32) -> (i32, i32) {
    %c0_i32 = arith.constant 0 : i32
    %c0_i32_0 = arith.constant 0 : i32
    return %c0_i32, %arg0 : i32, i32
  }
}

module attributes {stable_mosaic.version = 11 : i64} {
  func.func @_conv_kernel(%arg0: i32, %arg1: memref<80x128xbf16, #tpu.memory_space<vmem>>, %arg2: memref<8x80xbf16, #tpu.memory_space<vmem>>, %arg3: memref<8x1xf32, #tpu.memory_space<vmem>>, %arg4: memref<1xf32, #tpu.memory_space<smem>>, %arg5: memref<8x128xf32, #tpu.memory_space<vmem>>) attributes {dimension_semantics = [#tpu.dimension_semantics<parallel>], iteration_bounds = array<i64: 1>, scalar_prefetch = 0 : i64, scratch_operands = 0 : i64, tpu.core_type = #tpu.core_type<tc>, window_params = [{transform_indices = @transform_0, window_bounds = array<i64: 80, 128>}, {pipeline_mode = #tpu.pipeline_mode<synchronous>, transform_indices = @transform_1, window_bounds = array<i64: 8, 80>}, {pipeline_mode = #tpu.pipeline_mode<synchronous>, transform_indices = @transform_2, window_bounds = array<i64: 8, 1>}, {transform_indices = @transform_3, window_bounds = array<i64: 1>}, {transform_indices = @transform_4, window_bounds = array<i64: 8, 128>}]} {
    %c0 = arith.constant 0 : index
    %c0_0 = arith.constant 0 : index
    %0 = vector.load %arg2[%c0, %c0_0] : memref<8x80xbf16, #tpu.memory_space<vmem>>, vector<8x80xbf16>
    %c0_1 = arith.constant 0 : index
    %c0_2 = arith.constant 0 : index
    %1 = vector.load %arg1[%c0_1, %c0_2] : memref<80x128xbf16, #tpu.memory_space<vmem>>, vector<80x128xbf16>
    %cst = arith.constant dense<0.000000e+00> : vector<8x128xf32>
    %2 = tpu.matmul %0, %1, %cst {dimension_numbers = #tpu.dot_dimension_numbers<[1], [0], [0], [1], [0, 0, 1, 1], [], []>} : vector<8x80xbf16>, vector<80x128xbf16>, vector<8x128xf32> -> vector<8x128xf32>
    %c0_3 = arith.constant 0 : index
    %c0_4 = arith.constant 0 : index
    %3 = vector.load %arg3[%c0_3, %c0_4] : memref<8x1xf32, #tpu.memory_space<vmem>>, vector<8x1xf32>
    %4 = vector.broadcast %3 : vector<8x1xf32> to vector<8x128xf32>
    %5 = arith.addf %2, %4 : vector<8x128xf32>
    %c0_5 = arith.constant 0 : index
    %6 = memref.load %arg4[%c0_5] : memref<1xf32, #tpu.memory_space<smem>>
    %cst_6 = arith.constant 0.000000e+00 : f32
    %7 = vector.broadcast %cst_6 : f32 to vector<8x128xf32>
    %8 = arith.cmpf oge, %5, %7 : vector<8x128xf32>
    %9 = vector.broadcast %6 : f32 to vector<8x128xf32>
    %10 = arith.mulf %9, %5 : vector<8x128xf32>
    %11 = arith.select %8, %5, %10 : vector<8x128xi1>, vector<8x128xf32>
    %c0_7 = arith.constant 0 : index
    %c0_8 = arith.constant 0 : index
    %12 = vector.load %arg5[%c0_7, %c0_8] : memref<8x128xf32, #tpu.memory_space<vmem>>, vector<8x128xf32>
    tpu.vector_store %arg5[%c0_7, %c0_8], %11 {strides = array<i32>} : memref<8x128xf32, #tpu.memory_space<vmem>>, vector<8x128xf32>,
    return
  }
  func.func @transform_0(%arg0: i32) -> (i32, i32) {
    %c0_i32 = arith.constant 0 : i32
    %c0_i32_0 = arith.constant 0 : i32
    return %c0_i32, %arg0 : i32, i32
  }
  func.func @transform_1(%arg0: i32) -> (i32, i32) {
    %c0_i32 = arith.constant 0 : i32
    %c0_i32_0 = arith.constant 0 : i32
    %c0_i32_1 = arith.constant 0 : i32
    return %c0_i32, %c0_i32_0 : i32, i32
  }
  func.func @transform_2(%arg0: i32) -> (i32, i32) {
    %c0_i32 = arith.constant 0 : i32
    %c0_i32_0 = arith.constant 0 : i32
    %c0_i32_1 = arith.constant 0 : i32
    return %c0_i32, %c0_i32_0 : i32, i32
  }
  func.func @transform_3(%arg0: i32) -> i32 {
    %c0_i32 = arith.constant 0 : i32
    %c0_i32_0 = arith.constant 0 : i32
    return %c0_i32 : i32
  }
  func.func @transform_4(%arg0: i32) -> (i32, i32) {
    %c0_i32 = arith.constant 0 : i32
    %c0_i32_0 = arith.constant 0 : i32
    return %c0_i32, %arg0 : i32, i32
  }
}

module attributes {stable_mosaic.version = 11 : i64} {
  func.func @_conv_kernel(%arg0: i32, %arg1: memref<48x128xbf16, #tpu.memory_space<vmem>>, %arg2: memref<8x48xbf16, #tpu.memory_space<vmem>>, %arg3: memref<8x1xf32, #tpu.memory_space<vmem>>, %arg4: memref<1xf32, #tpu.memory_space<smem>>, %arg5: memref<8x128xf32, #tpu.memory_space<vmem>>) attributes {dimension_semantics = [#tpu.dimension_semantics<parallel>], iteration_bounds = array<i64: 1>, scalar_prefetch = 0 : i64, scratch_operands = 0 : i64, tpu.core_type = #tpu.core_type<tc>, window_params = [{transform_indices = @transform_0, window_bounds = array<i64: 48, 128>}, {pipeline_mode = #tpu.pipeline_mode<synchronous>, transform_indices = @transform_1, window_bounds = array<i64: 8, 48>}, {pipeline_mode = #tpu.pipeline_mode<synchronous>, transform_indices = @transform_2, window_bounds = array<i64: 8, 1>}, {transform_indices = @transform_3, window_bounds = array<i64: 1>}, {transform_indices = @transform_4, window_bounds = array<i64: 8, 128>}]} {
    %c0 = arith.constant 0 : index
    %c0_0 = arith.constant 0 : index
    %0 = vector.load %arg2[%c0, %c0_0] : memref<8x48xbf16, #tpu.memory_space<vmem>>, vector<8x48xbf16>
    %c0_1 = arith.constant 0 : index
    %c0_2 = arith.constant 0 : index
    %1 = vector.load %arg1[%c0_1, %c0_2] : memref<48x128xbf16, #tpu.memory_space<vmem>>, vector<48x128xbf16>
    %cst = arith.constant dense<0.000000e+00> : vector<8x128xf32>
    %2 = tpu.matmul %0, %1, %cst {dimension_numbers = #tpu.dot_dimension_numbers<[1], [0], [0], [1], [0, 0, 1, 1], [], []>} : vector<8x48xbf16>, vector<48x128xbf16>, vector<8x128xf32> -> vector<8x128xf32>
    %c0_3 = arith.constant 0 : index
    %c0_4 = arith.constant 0 : index
    %3 = vector.load %arg3[%c0_3, %c0_4] : memref<8x1xf32, #tpu.memory_space<vmem>>, vector<8x1xf32>
    %4 = vector.broadcast %3 : vector<8x1xf32> to vector<8x128xf32>
    %5 = arith.addf %2, %4 : vector<8x128xf32>
    %c0_5 = arith.constant 0 : index
    %c0_6 = arith.constant 0 : index
    %6 = vector.load %arg5[%c0_5, %c0_6] : memref<8x128xf32, #tpu.memory_space<vmem>>, vector<8x128xf32>
    tpu.vector_store %arg5[%c0_5, %c0_6], %5 {strides = array<i32>} : memref<8x128xf32, #tpu.memory_space<vmem>>, vector<8x128xf32>,
    return
  }
  func.func @transform_0(%arg0: i32) -> (i32, i32) {
    %c0_i32 = arith.constant 0 : i32
    %c0_i32_0 = arith.constant 0 : i32
    return %c0_i32, %arg0 : i32, i32
  }
  func.func @transform_1(%arg0: i32) -> (i32, i32) {
    %c0_i32 = arith.constant 0 : i32
    %c0_i32_0 = arith.constant 0 : i32
    %c0_i32_1 = arith.constant 0 : i32
    return %c0_i32, %c0_i32_0 : i32, i32
  }
  func.func @transform_2(%arg0: i32) -> (i32, i32) {
    %c0_i32 = arith.constant 0 : i32
    %c0_i32_0 = arith.constant 0 : i32
    %c0_i32_1 = arith.constant 0 : i32
    return %c0_i32, %c0_i32_0 : i32, i32
  }
  func.func @transform_3(%arg0: i32) -> i32 {
    %c0_i32 = arith.constant 0 : i32
    %c0_i32_0 = arith.constant 0 : i32
    return %c0_i32 : i32
  }
  func.func @transform_4(%arg0: i32) -> (i32, i32) {
    %c0_i32 = arith.constant 0 : i32
    %c0_i32_0 = arith.constant 0 : i32
    return %c0_i32, %arg0 : i32, i32
  }
}

module attributes {stable_mosaic.version = 11 : i64} {
  func.func @_conv_add_kernel(%arg0: i32, %arg1: memref<80x128xbf16, #tpu.memory_space<vmem>>, %arg2: memref<8x80xbf16, #tpu.memory_space<vmem>>, %arg3: memref<8x1xf32, #tpu.memory_space<vmem>>, %arg4: memref<1xf32, #tpu.memory_space<smem>>, %arg5: memref<8x128xf32, #tpu.memory_space<vmem>>, %arg6: memref<8x128xf32, #tpu.memory_space<vmem>>, %arg7: memref<8x128xf32, #tpu.memory_space<vmem>>) attributes {dimension_semantics = [#tpu.dimension_semantics<parallel>], iteration_bounds = array<i64: 1>, scalar_prefetch = 0 : i64, scratch_operands = 0 : i64, tpu.core_type = #tpu.core_type<tc>, window_params = [{transform_indices = @transform_0, window_bounds = array<i64: 80, 128>}, {pipeline_mode = #tpu.pipeline_mode<synchronous>, transform_indices = @transform_1, window_bounds = array<i64: 8, 80>}, {pipeline_mode = #tpu.pipeline_mode<synchronous>, transform_indices = @transform_2, window_bounds = array<i64: 8, 1>}, {transform_indices = @transform_3, window_bounds = array<i64: 1>}, {transform_indices = @transform_4, window_bounds = array<i64: 8, 128>}, {transform_indices = @transform_5, window_bounds = array<i64: 8, 128>}, {transform_indices = @transform_6, window_bounds = array<i64: 8, 128>}]} {
    %c0 = arith.constant 0 : index
    %c0_0 = arith.constant 0 : index
    %0 = vector.load %arg2[%c0, %c0_0] : memref<8x80xbf16, #tpu.memory_space<vmem>>, vector<8x80xbf16>
    %c0_1 = arith.constant 0 : index
    %c0_2 = arith.constant 0 : index
    %1 = vector.load %arg1[%c0_1, %c0_2] : memref<80x128xbf16, #tpu.memory_space<vmem>>, vector<80x128xbf16>
    %cst = arith.constant dense<0.000000e+00> : vector<8x128xf32>
    %2 = tpu.matmul %0, %1, %cst {dimension_numbers = #tpu.dot_dimension_numbers<[1], [0], [0], [1], [0, 0, 1, 1], [], []>} : vector<8x80xbf16>, vector<80x128xbf16>, vector<8x128xf32> -> vector<8x128xf32>
    %c0_3 = arith.constant 0 : index
    %c0_4 = arith.constant 0 : index
    %3 = vector.load %arg3[%c0_3, %c0_4] : memref<8x1xf32, #tpu.memory_space<vmem>>, vector<8x1xf32>
    %4 = vector.broadcast %3 : vector<8x1xf32> to vector<8x128xf32>
    %5 = arith.addf %2, %4 : vector<8x128xf32>
    %c0_5 = arith.constant 0 : index
    %6 = memref.load %arg4[%c0_5] : memref<1xf32, #tpu.memory_space<smem>>
    %cst_6 = arith.constant 0.000000e+00 : f32
    %7 = vector.broadcast %cst_6 : f32 to vector<8x128xf32>
    %8 = arith.cmpf oge, %5, %7 : vector<8x128xf32>
    %9 = vector.broadcast %6 : f32 to vector<8x128xf32>
    %10 = arith.mulf %9, %5 : vector<8x128xf32>
    %11 = arith.select %8, %5, %10 : vector<8x128xi1>, vector<8x128xf32>
    %c0_7 = arith.constant 0 : index
    %c0_8 = arith.constant 0 : index
    %12 = vector.load %arg6[%c0_7, %c0_8] : memref<8x128xf32, #tpu.memory_space<vmem>>, vector<8x128xf32>
    tpu.vector_store %arg6[%c0_7, %c0_8], %11 {strides = array<i32>} : memref<8x128xf32, #tpu.memory_space<vmem>>, vector<8x128xf32>,
    %c0_9 = arith.constant 0 : index
    %c0_10 = arith.constant 0 : index
    %13 = vector.load %arg5[%c0_9, %c0_10] : memref<8x128xf32, #tpu.memory_space<vmem>>, vector<8x128xf32>
    %14 = arith.addf %11, %13 : vector<8x128xf32>
    %c0_11 = arith.constant 0 : index
    %c0_12 = arith.constant 0 : index
    %15 = vector.load %arg7[%c0_11, %c0_12] : memref<8x128xf32, #tpu.memory_space<vmem>>, vector<8x128xf32>
    tpu.vector_store %arg7[%c0_11, %c0_12], %14 {strides = array<i32>} : memref<8x128xf32, #tpu.memory_space<vmem>>, vector<8x128xf32>,
    return
  }
  func.func @transform_0(%arg0: i32) -> (i32, i32) {
    %c0_i32 = arith.constant 0 : i32
    %c0_i32_0 = arith.constant 0 : i32
    return %c0_i32, %arg0 : i32, i32
  }
  func.func @transform_1(%arg0: i32) -> (i32, i32) {
    %c0_i32 = arith.constant 0 : i32
    %c0_i32_0 = arith.constant 0 : i32
    %c0_i32_1 = arith.constant 0 : i32
    return %c0_i32, %c0_i32_0 : i32, i32
  }
  func.func @transform_2(%arg0: i32) -> (i32, i32) {
    %c0_i32 = arith.constant 0 : i32
    %c0_i32_0 = arith.constant 0 : i32
    %c0_i32_1 = arith.constant 0 : i32
    return %c0_i32, %c0_i32_0 : i32, i32
  }
  func.func @transform_3(%arg0: i32) -> i32 {
    %c0_i32 = arith.constant 0 : i32
    %c0_i32_0 = arith.constant 0 : i32
    return %c0_i32 : i32
  }
  func.func @transform_4(%arg0: i32) -> (i32, i32) {
    %c0_i32 = arith.constant 0 : i32
    %c0_i32_0 = arith.constant 0 : i32
    return %c0_i32, %arg0 : i32, i32
  }
  func.func @transform_5(%arg0: i32) -> (i32, i32) {
    %c0_i32 = arith.constant 0 : i32
    %c0_i32_0 = arith.constant 0 : i32
    return %c0_i32, %arg0 : i32, i32
  }
  func.func @transform_6(%arg0: i32) -> (i32, i32) {
    %c0_i32 = arith.constant 0 : i32
    %c0_i32_0 = arith.constant 0 : i32
    return %c0_i32, %arg0 : i32, i32
  }
}

module attributes {stable_mosaic.version = 11 : i64} {
  func.func @_conv_kernel(%arg0: i32, %arg1: memref<80x128xbf16, #tpu.memory_space<vmem>>, %arg2: memref<16x80xbf16, #tpu.memory_space<vmem>>, %arg3: memref<16x1xf32, #tpu.memory_space<vmem>>, %arg4: memref<1xf32, #tpu.memory_space<smem>>, %arg5: memref<16x128xf32, #tpu.memory_space<vmem>>) attributes {dimension_semantics = [#tpu.dimension_semantics<parallel>], iteration_bounds = array<i64: 1>, scalar_prefetch = 0 : i64, scratch_operands = 0 : i64, tpu.core_type = #tpu.core_type<tc>, window_params = [{transform_indices = @transform_0, window_bounds = array<i64: 80, 128>}, {pipeline_mode = #tpu.pipeline_mode<synchronous>, transform_indices = @transform_1, window_bounds = array<i64: 16, 80>}, {pipeline_mode = #tpu.pipeline_mode<synchronous>, transform_indices = @transform_2, window_bounds = array<i64: 16, 1>}, {transform_indices = @transform_3, window_bounds = array<i64: 1>}, {transform_indices = @transform_4, window_bounds = array<i64: 16, 128>}]} {
    %c0 = arith.constant 0 : index
    %c0_0 = arith.constant 0 : index
    %0 = vector.load %arg2[%c0, %c0_0] : memref<16x80xbf16, #tpu.memory_space<vmem>>, vector<16x80xbf16>
    %c0_1 = arith.constant 0 : index
    %c0_2 = arith.constant 0 : index
    %1 = vector.load %arg1[%c0_1, %c0_2] : memref<80x128xbf16, #tpu.memory_space<vmem>>, vector<80x128xbf16>
    %cst = arith.constant dense<0.000000e+00> : vector<16x128xf32>
    %2 = tpu.matmul %0, %1, %cst {dimension_numbers = #tpu.dot_dimension_numbers<[1], [0], [0], [1], [0, 0, 1, 1], [], []>} : vector<16x80xbf16>, vector<80x128xbf16>, vector<16x128xf32> -> vector<16x128xf32>
    %c0_3 = arith.constant 0 : index
    %c0_4 = arith.constant 0 : index
    %3 = vector.load %arg3[%c0_3, %c0_4] : memref<16x1xf32, #tpu.memory_space<vmem>>, vector<16x1xf32>
    %4 = vector.broadcast %3 : vector<16x1xf32> to vector<16x128xf32>
    %5 = arith.addf %2, %4 : vector<16x128xf32>
    %c0_5 = arith.constant 0 : index
    %6 = memref.load %arg4[%c0_5] : memref<1xf32, #tpu.memory_space<smem>>
    %cst_6 = arith.constant 0.000000e+00 : f32
    %7 = vector.broadcast %cst_6 : f32 to vector<16x128xf32>
    %8 = arith.cmpf oge, %5, %7 : vector<16x128xf32>
    %9 = vector.broadcast %6 : f32 to vector<16x128xf32>
    %10 = arith.mulf %9, %5 : vector<16x128xf32>
    %11 = arith.select %8, %5, %10 : vector<16x128xi1>, vector<16x128xf32>
    %c0_7 = arith.constant 0 : index
    %c0_8 = arith.constant 0 : index
    %12 = vector.load %arg5[%c0_7, %c0_8] : memref<16x128xf32, #tpu.memory_space<vmem>>, vector<16x128xf32>
    tpu.vector_store %arg5[%c0_7, %c0_8], %11 {strides = array<i32>} : memref<16x128xf32, #tpu.memory_space<vmem>>, vector<16x128xf32>,
    return
  }
  func.func @transform_0(%arg0: i32) -> (i32, i32) {
    %c0_i32 = arith.constant 0 : i32
    %c0_i32_0 = arith.constant 0 : i32
    return %c0_i32, %arg0 : i32, i32
  }
  func.func @transform_1(%arg0: i32) -> (i32, i32) {
    %c0_i32 = arith.constant 0 : i32
    %c0_i32_0 = arith.constant 0 : i32
    %c0_i32_1 = arith.constant 0 : i32
    return %c0_i32, %c0_i32_0 : i32, i32
  }
  func.func @transform_2(%arg0: i32) -> (i32, i32) {
    %c0_i32 = arith.constant 0 : i32
    %c0_i32_0 = arith.constant 0 : i32
    %c0_i32_1 = arith.constant 0 : i32
    return %c0_i32, %c0_i32_0 : i32, i32
  }
  func.func @transform_3(%arg0: i32) -> i32 {
    %c0_i32 = arith.constant 0 : i32
    %c0_i32_0 = arith.constant 0 : i32
    return %c0_i32 : i32
  }
  func.func @transform_4(%arg0: i32) -> (i32, i32) {
    %c0_i32 = arith.constant 0 : i32
    %c0_i32_0 = arith.constant 0 : i32
    return %c0_i32, %arg0 : i32, i32
  }
}

module attributes {stable_mosaic.version = 11 : i64} {
  func.func @_conv_kernel(%arg0: i32, %arg1: memref<80x128xbf16, #tpu.memory_space<vmem>>, %arg2: memref<16x80xbf16, #tpu.memory_space<vmem>>, %arg3: memref<16x1xf32, #tpu.memory_space<vmem>>, %arg4: memref<1xf32, #tpu.memory_space<smem>>, %arg5: memref<16x128xf32, #tpu.memory_space<vmem>>) attributes {dimension_semantics = [#tpu.dimension_semantics<parallel>], iteration_bounds = array<i64: 1>, scalar_prefetch = 0 : i64, scratch_operands = 0 : i64, tpu.core_type = #tpu.core_type<tc>, window_params = [{transform_indices = @transform_0, window_bounds = array<i64: 80, 128>}, {pipeline_mode = #tpu.pipeline_mode<synchronous>, transform_indices = @transform_1, window_bounds = array<i64: 16, 80>}, {pipeline_mode = #tpu.pipeline_mode<synchronous>, transform_indices = @transform_2, window_bounds = array<i64: 16, 1>}, {transform_indices = @transform_3, window_bounds = array<i64: 1>}, {transform_indices = @transform_4, window_bounds = array<i64: 16, 128>}]} {
    %c0 = arith.constant 0 : index
    %c0_0 = arith.constant 0 : index
    %0 = vector.load %arg2[%c0, %c0_0] : memref<16x80xbf16, #tpu.memory_space<vmem>>, vector<16x80xbf16>
    %c0_1 = arith.constant 0 : index
    %c0_2 = arith.constant 0 : index
    %1 = vector.load %arg1[%c0_1, %c0_2] : memref<80x128xbf16, #tpu.memory_space<vmem>>, vector<80x128xbf16>
    %cst = arith.constant dense<0.000000e+00> : vector<16x128xf32>
    %2 = tpu.matmul %0, %1, %cst {dimension_numbers = #tpu.dot_dimension_numbers<[1], [0], [0], [1], [0, 0, 1, 1], [], []>} : vector<16x80xbf16>, vector<80x128xbf16>, vector<16x128xf32> -> vector<16x128xf32>
    %c0_3 = arith.constant 0 : index
    %c0_4 = arith.constant 0 : index
    %3 = vector.load %arg3[%c0_3, %c0_4] : memref<16x1xf32, #tpu.memory_space<vmem>>, vector<16x1xf32>
    %4 = vector.broadcast %3 : vector<16x1xf32> to vector<16x128xf32>
    %5 = arith.addf %2, %4 : vector<16x128xf32>
    %c0_5 = arith.constant 0 : index
    %c0_6 = arith.constant 0 : index
    %6 = vector.load %arg5[%c0_5, %c0_6] : memref<16x128xf32, #tpu.memory_space<vmem>>, vector<16x128xf32>
    tpu.vector_store %arg5[%c0_5, %c0_6], %5 {strides = array<i32>} : memref<16x128xf32, #tpu.memory_space<vmem>>, vector<16x128xf32>,
    return
  }
  func.func @transform_0(%arg0: i32) -> (i32, i32) {
    %c0_i32 = arith.constant 0 : i32
    %c0_i32_0 = arith.constant 0 : i32
    return %c0_i32, %arg0 : i32, i32
  }
  func.func @transform_1(%arg0: i32) -> (i32, i32) {
    %c0_i32 = arith.constant 0 : i32
    %c0_i32_0 = arith.constant 0 : i32
    %c0_i32_1 = arith.constant 0 : i32
    return %c0_i32, %c0_i32_0 : i32, i32
  }
  func.func @transform_2(%arg0: i32) -> (i32, i32) {
    %c0_i32 = arith.constant 0 : i32
    %c0_i32_0 = arith.constant 0 : i32
    %c0_i32_1 = arith.constant 0 : i32
    return %c0_i32, %c0_i32_0 : i32, i32
  }
  func.func @transform_3(%arg0: i32) -> i32 {
    %c0_i32 = arith.constant 0 : i32
    %c0_i32_0 = arith.constant 0 : i32
    return %c0_i32 : i32
  }
  func.func @transform_4(%arg0: i32) -> (i32, i32) {
    %c0_i32 = arith.constant 0 : i32
    %c0_i32_0 = arith.constant 0 : i32
    return %c0_i32, %arg0 : i32, i32
  }
}

module attributes {stable_mosaic.version = 11 : i64} {
  func.func @_conv_kernel(%arg0: i32, %arg1: memref<144x128xbf16, #tpu.memory_space<vmem>>, %arg2: memref<16x144xbf16, #tpu.memory_space<vmem>>, %arg3: memref<16x1xf32, #tpu.memory_space<vmem>>, %arg4: memref<1xf32, #tpu.memory_space<smem>>, %arg5: memref<16x128xf32, #tpu.memory_space<vmem>>) attributes {dimension_semantics = [#tpu.dimension_semantics<parallel>], iteration_bounds = array<i64: 1>, scalar_prefetch = 0 : i64, scratch_operands = 0 : i64, tpu.core_type = #tpu.core_type<tc>, window_params = [{transform_indices = @transform_0, window_bounds = array<i64: 144, 128>}, {pipeline_mode = #tpu.pipeline_mode<synchronous>, transform_indices = @transform_1, window_bounds = array<i64: 16, 144>}, {pipeline_mode = #tpu.pipeline_mode<synchronous>, transform_indices = @transform_2, window_bounds = array<i64: 16, 1>}, {transform_indices = @transform_3, window_bounds = array<i64: 1>}, {transform_indices = @transform_4, window_bounds = array<i64: 16, 128>}]} {
    %c0 = arith.constant 0 : index
    %c0_0 = arith.constant 0 : index
    %0 = vector.load %arg2[%c0, %c0_0] : memref<16x144xbf16, #tpu.memory_space<vmem>>, vector<16x144xbf16>
    %c0_1 = arith.constant 0 : index
    %c0_2 = arith.constant 0 : index
    %1 = vector.load %arg1[%c0_1, %c0_2] : memref<144x128xbf16, #tpu.memory_space<vmem>>, vector<144x128xbf16>
    %cst = arith.constant dense<0.000000e+00> : vector<16x128xf32>
    %2 = tpu.matmul %0, %1, %cst {dimension_numbers = #tpu.dot_dimension_numbers<[1], [0], [0], [1], [0, 0, 1, 1], [], []>} : vector<16x144xbf16>, vector<144x128xbf16>, vector<16x128xf32> -> vector<16x128xf32>
    %c0_3 = arith.constant 0 : index
    %c0_4 = arith.constant 0 : index
    %3 = vector.load %arg3[%c0_3, %c0_4] : memref<16x1xf32, #tpu.memory_space<vmem>>, vector<16x1xf32>
    %4 = vector.broadcast %3 : vector<16x1xf32> to vector<16x128xf32>
    %5 = arith.addf %2, %4 : vector<16x128xf32>
    %c0_5 = arith.constant 0 : index
    %6 = memref.load %arg4[%c0_5] : memref<1xf32, #tpu.memory_space<smem>>
    %cst_6 = arith.constant 0.000000e+00 : f32
    %7 = vector.broadcast %cst_6 : f32 to vector<16x128xf32>
    %8 = arith.cmpf oge, %5, %7 : vector<16x128xf32>
    %9 = vector.broadcast %6 : f32 to vector<16x128xf32>
    %10 = arith.mulf %9, %5 : vector<16x128xf32>
    %11 = arith.select %8, %5, %10 : vector<16x128xi1>, vector<16x128xf32>
    %c0_7 = arith.constant 0 : index
    %c0_8 = arith.constant 0 : index
    %12 = vector.load %arg5[%c0_7, %c0_8] : memref<16x128xf32, #tpu.memory_space<vmem>>, vector<16x128xf32>
    tpu.vector_store %arg5[%c0_7, %c0_8], %11 {strides = array<i32>} : memref<16x128xf32, #tpu.memory_space<vmem>>, vector<16x128xf32>,
    return
  }
  func.func @transform_0(%arg0: i32) -> (i32, i32) {
    %c0_i32 = arith.constant 0 : i32
    %c0_i32_0 = arith.constant 0 : i32
    return %c0_i32, %arg0 : i32, i32
  }
  func.func @transform_1(%arg0: i32) -> (i32, i32) {
    %c0_i32 = arith.constant 0 : i32
    %c0_i32_0 = arith.constant 0 : i32
    %c0_i32_1 = arith.constant 0 : i32
    return %c0_i32, %c0_i32_0 : i32, i32
  }
  func.func @transform_2(%arg0: i32) -> (i32, i32) {
    %c0_i32 = arith.constant 0 : i32
    %c0_i32_0 = arith.constant 0 : i32
    %c0_i32_1 = arith.constant 0 : i32
    return %c0_i32, %c0_i32_0 : i32, i32
  }
  func.func @transform_3(%arg0: i32) -> i32 {
    %c0_i32 = arith.constant 0 : i32
    %c0_i32_0 = arith.constant 0 : i32
    return %c0_i32 : i32
  }
  func.func @transform_4(%arg0: i32) -> (i32, i32) {
    %c0_i32 = arith.constant 0 : i32
    %c0_i32_0 = arith.constant 0 : i32
    return %c0_i32, %arg0 : i32, i32
  }
}

module attributes {stable_mosaic.version = 11 : i64} {
  func.func @_conv_add_kernel(%arg0: i32, %arg1: memref<144x128xbf16, #tpu.memory_space<vmem>>, %arg2: memref<16x144xbf16, #tpu.memory_space<vmem>>, %arg3: memref<16x1xf32, #tpu.memory_space<vmem>>, %arg4: memref<1xf32, #tpu.memory_space<smem>>, %arg5: memref<16x128xf32, #tpu.memory_space<vmem>>, %arg6: memref<16x128xf32, #tpu.memory_space<vmem>>, %arg7: memref<16x128xf32, #tpu.memory_space<vmem>>) attributes {dimension_semantics = [#tpu.dimension_semantics<parallel>], iteration_bounds = array<i64: 1>, scalar_prefetch = 0 : i64, scratch_operands = 0 : i64, tpu.core_type = #tpu.core_type<tc>, window_params = [{transform_indices = @transform_0, window_bounds = array<i64: 144, 128>}, {pipeline_mode = #tpu.pipeline_mode<synchronous>, transform_indices = @transform_1, window_bounds = array<i64: 16, 144>}, {pipeline_mode = #tpu.pipeline_mode<synchronous>, transform_indices = @transform_2, window_bounds = array<i64: 16, 1>}, {transform_indices = @transform_3, window_bounds = array<i64: 1>}, {transform_indices = @transform_4, window_bounds = array<i64: 16, 128>}, {transform_indices = @transform_5, window_bounds = array<i64: 16, 128>}, {transform_indices = @transform_6, window_bounds = array<i64: 16, 128>}]} {
    %c0 = arith.constant 0 : index
    %c0_0 = arith.constant 0 : index
    %0 = vector.load %arg2[%c0, %c0_0] : memref<16x144xbf16, #tpu.memory_space<vmem>>, vector<16x144xbf16>
    %c0_1 = arith.constant 0 : index
    %c0_2 = arith.constant 0 : index
    %1 = vector.load %arg1[%c0_1, %c0_2] : memref<144x128xbf16, #tpu.memory_space<vmem>>, vector<144x128xbf16>
    %cst = arith.constant dense<0.000000e+00> : vector<16x128xf32>
    %2 = tpu.matmul %0, %1, %cst {dimension_numbers = #tpu.dot_dimension_numbers<[1], [0], [0], [1], [0, 0, 1, 1], [], []>} : vector<16x144xbf16>, vector<144x128xbf16>, vector<16x128xf32> -> vector<16x128xf32>
    %c0_3 = arith.constant 0 : index
    %c0_4 = arith.constant 0 : index
    %3 = vector.load %arg3[%c0_3, %c0_4] : memref<16x1xf32, #tpu.memory_space<vmem>>, vector<16x1xf32>
    %4 = vector.broadcast %3 : vector<16x1xf32> to vector<16x128xf32>
    %5 = arith.addf %2, %4 : vector<16x128xf32>
    %c0_5 = arith.constant 0 : index
    %6 = memref.load %arg4[%c0_5] : memref<1xf32, #tpu.memory_space<smem>>
    %cst_6 = arith.constant 0.000000e+00 : f32
    %7 = vector.broadcast %cst_6 : f32 to vector<16x128xf32>
    %8 = arith.cmpf oge, %5, %7 : vector<16x128xf32>
    %9 = vector.broadcast %6 : f32 to vector<16x128xf32>
    %10 = arith.mulf %9, %5 : vector<16x128xf32>
    %11 = arith.select %8, %5, %10 : vector<16x128xi1>, vector<16x128xf32>
    %c0_7 = arith.constant 0 : index
    %c0_8 = arith.constant 0 : index
    %12 = vector.load %arg6[%c0_7, %c0_8] : memref<16x128xf32, #tpu.memory_space<vmem>>, vector<16x128xf32>
    tpu.vector_store %arg6[%c0_7, %c0_8], %11 {strides = array<i32>} : memref<16x128xf32, #tpu.memory_space<vmem>>, vector<16x128xf32>,
    %c0_9 = arith.constant 0 : index
    %c0_10 = arith.constant 0 : index
    %13 = vector.load %arg5[%c0_9, %c0_10] : memref<16x128xf32, #tpu.memory_space<vmem>>, vector<16x128xf32>
    %14 = arith.addf %11, %13 : vector<16x128xf32>
    %c0_11 = arith.constant 0 : index
    %c0_12 = arith.constant 0 : index
    %15 = vector.load %arg7[%c0_11, %c0_12] : memref<16x128xf32, #tpu.memory_space<vmem>>, vector<16x128xf32>
    tpu.vector_store %arg7[%c0_11, %c0_12], %14 {strides = array<i32>} : memref<16x128xf32, #tpu.memory_space<vmem>>, vector<16x128xf32>,
    return
  }
  func.func @transform_0(%arg0: i32) -> (i32, i32) {
    %c0_i32 = arith.constant 0 : i32
    %c0_i32_0 = arith.constant 0 : i32
    return %c0_i32, %arg0 : i32, i32
  }
  func.func @transform_1(%arg0: i32) -> (i32, i32) {
    %c0_i32 = arith.constant 0 : i32
    %c0_i32_0 = arith.constant 0 : i32
    %c0_i32_1 = arith.constant 0 : i32
    return %c0_i32, %c0_i32_0 : i32, i32
  }
  func.func @transform_2(%arg0: i32) -> (i32, i32) {
    %c0_i32 = arith.constant 0 : i32
    %c0_i32_0 = arith.constant 0 : i32
    %c0_i32_1 = arith.constant 0 : i32
    return %c0_i32, %c0_i32_0 : i32, i32
  }
  func.func @transform_3(%arg0: i32) -> i32 {
    %c0_i32 = arith.constant 0 : i32
    %c0_i32_0 = arith.constant 0 : i32
    return %c0_i32 : i32
  }
  func.func @transform_4(%arg0: i32) -> (i32, i32) {
    %c0_i32 = arith.constant 0 : i32
    %c0_i32_0 = arith.constant 0 : i32
    return %c0_i32, %arg0 : i32, i32
  }
  func.func @transform_5(%arg0: i32) -> (i32, i32) {
    %c0_i32 = arith.constant 0 : i32
    %c0_i32_0 = arith.constant 0 : i32
    return %c0_i32, %arg0 : i32, i32
  }
  func.func @transform_6(%arg0: i32) -> (i32, i32) {
    %c0_i32 = arith.constant 0 : i32
    %c0_i32_0 = arith.constant 0 : i32
    return %c0_i32, %arg0 : i32, i32
  }
}

module attributes {stable_mosaic.version = 11 : i64} {
  func.func @_conv_kernel(%arg0: i32, %arg1: memref<144x128xbf16, #tpu.memory_space<vmem>>, %arg2: memref<32x144xbf16, #tpu.memory_space<vmem>>, %arg3: memref<32x1xf32, #tpu.memory_space<vmem>>, %arg4: memref<1xf32, #tpu.memory_space<smem>>, %arg5: memref<32x128xf32, #tpu.memory_space<vmem>>) attributes {dimension_semantics = [#tpu.dimension_semantics<parallel>], iteration_bounds = array<i64: 1>, scalar_prefetch = 0 : i64, scratch_operands = 0 : i64, tpu.core_type = #tpu.core_type<tc>, window_params = [{transform_indices = @transform_0, window_bounds = array<i64: 144, 128>}, {pipeline_mode = #tpu.pipeline_mode<synchronous>, transform_indices = @transform_1, window_bounds = array<i64: 32, 144>}, {pipeline_mode = #tpu.pipeline_mode<synchronous>, transform_indices = @transform_2, window_bounds = array<i64: 32, 1>}, {transform_indices = @transform_3, window_bounds = array<i64: 1>}, {transform_indices = @transform_4, window_bounds = array<i64: 32, 128>}]} {
    %c0 = arith.constant 0 : index
    %c0_0 = arith.constant 0 : index
    %0 = vector.load %arg2[%c0, %c0_0] : memref<32x144xbf16, #tpu.memory_space<vmem>>, vector<32x144xbf16>
    %c0_1 = arith.constant 0 : index
    %c0_2 = arith.constant 0 : index
    %1 = vector.load %arg1[%c0_1, %c0_2] : memref<144x128xbf16, #tpu.memory_space<vmem>>, vector<144x128xbf16>
    %cst = arith.constant dense<0.000000e+00> : vector<32x128xf32>
    %2 = tpu.matmul %0, %1, %cst {dimension_numbers = #tpu.dot_dimension_numbers<[1], [0], [0], [1], [0, 0, 1, 1], [], []>} : vector<32x144xbf16>, vector<144x128xbf16>, vector<32x128xf32> -> vector<32x128xf32>
    %c0_3 = arith.constant 0 : index
    %c0_4 = arith.constant 0 : index
    %3 = vector.load %arg3[%c0_3, %c0_4] : memref<32x1xf32, #tpu.memory_space<vmem>>, vector<32x1xf32>
    %4 = vector.broadcast %3 : vector<32x1xf32> to vector<32x128xf32>
    %5 = arith.addf %2, %4 : vector<32x128xf32>
    %c0_5 = arith.constant 0 : index
    %c0_6 = arith.constant 0 : index
    %6 = vector.load %arg5[%c0_5, %c0_6] : memref<32x128xf32, #tpu.memory_space<vmem>>, vector<32x128xf32>
    tpu.vector_store %arg5[%c0_5, %c0_6], %5 {strides = array<i32>} : memref<32x128xf32, #tpu.memory_space<vmem>>, vector<32x128xf32>,
    return
  }
  func.func @transform_0(%arg0: i32) -> (i32, i32) {
    %c0_i32 = arith.constant 0 : i32
    %c0_i32_0 = arith.constant 0 : i32
    return %c0_i32, %arg0 : i32, i32
  }
  func.func @transform_1(%arg0: i32) -> (i32, i32) {
    %c0_i32 = arith.constant 0 : i32
    %c0_i32_0 = arith.constant 0 : i32
    %c0_i32_1 = arith.constant 0 : i32
    return %c0_i32, %c0_i32_0 : i32, i32
  }
  func.func @transform_2(%arg0: i32) -> (i32, i32) {
    %c0_i32 = arith.constant 0 : i32
    %c0_i32_0 = arith.constant 0 : i32
    %c0_i32_1 = arith.constant 0 : i32
    return %c0_i32, %c0_i32_0 : i32, i32
  }
  func.func @transform_3(%arg0: i32) -> i32 {
    %c0_i32 = arith.constant 0 : i32
    %c0_i32_0 = arith.constant 0 : i32
    return %c0_i32 : i32
  }
  func.func @transform_4(%arg0: i32) -> (i32, i32) {
    %c0_i32 = arith.constant 0 : i32
    %c0_i32_0 = arith.constant 0 : i32
    return %c0_i32, %arg0 : i32, i32
  }
}

module attributes {stable_mosaic.version = 11 : i64} {
  func.func @_conv_kernel(%arg0: i32, %arg1: memref<288x128xbf16, #tpu.memory_space<vmem>>, %arg2: memref<32x288xbf16, #tpu.memory_space<vmem>>, %arg3: memref<32x1xf32, #tpu.memory_space<vmem>>, %arg4: memref<1xf32, #tpu.memory_space<smem>>, %arg5: memref<32x128xf32, #tpu.memory_space<vmem>>) attributes {dimension_semantics = [#tpu.dimension_semantics<parallel>], iteration_bounds = array<i64: 1>, scalar_prefetch = 0 : i64, scratch_operands = 0 : i64, tpu.core_type = #tpu.core_type<tc>, window_params = [{transform_indices = @transform_0, window_bounds = array<i64: 288, 128>}, {pipeline_mode = #tpu.pipeline_mode<synchronous>, transform_indices = @transform_1, window_bounds = array<i64: 32, 288>}, {pipeline_mode = #tpu.pipeline_mode<synchronous>, transform_indices = @transform_2, window_bounds = array<i64: 32, 1>}, {transform_indices = @transform_3, window_bounds = array<i64: 1>}, {transform_indices = @transform_4, window_bounds = array<i64: 32, 128>}]} {
    %c0 = arith.constant 0 : index
    %c0_0 = arith.constant 0 : index
    %0 = vector.load %arg2[%c0, %c0_0] : memref<32x288xbf16, #tpu.memory_space<vmem>>, vector<32x288xbf16>
    %c0_1 = arith.constant 0 : index
    %c0_2 = arith.constant 0 : index
    %1 = vector.load %arg1[%c0_1, %c0_2] : memref<288x128xbf16, #tpu.memory_space<vmem>>, vector<288x128xbf16>
    %cst = arith.constant dense<0.000000e+00> : vector<32x128xf32>
    %2 = tpu.matmul %0, %1, %cst {dimension_numbers = #tpu.dot_dimension_numbers<[1], [0], [0], [1], [0, 0, 1, 1], [], []>} : vector<32x288xbf16>, vector<288x128xbf16>, vector<32x128xf32> -> vector<32x128xf32>
    %c0_3 = arith.constant 0 : index
    %c0_4 = arith.constant 0 : index
    %3 = vector.load %arg3[%c0_3, %c0_4] : memref<32x1xf32, #tpu.memory_space<vmem>>, vector<32x1xf32>
    %4 = vector.broadcast %3 : vector<32x1xf32> to vector<32x128xf32>
    %5 = arith.addf %2, %4 : vector<32x128xf32>
    %c0_5 = arith.constant 0 : index
    %6 = memref.load %arg4[%c0_5] : memref<1xf32, #tpu.memory_space<smem>>
    %cst_6 = arith.constant 0.000000e+00 : f32
    %7 = vector.broadcast %cst_6 : f32 to vector<32x128xf32>
    %8 = arith.cmpf oge, %5, %7 : vector<32x128xf32>
    %9 = vector.broadcast %6 : f32 to vector<32x128xf32>
    %10 = arith.mulf %9, %5 : vector<32x128xf32>
    %11 = arith.select %8, %5, %10 : vector<32x128xi1>, vector<32x128xf32>
    %c0_7 = arith.constant 0 : index
    %c0_8 = arith.constant 0 : index
    %12 = vector.load %arg5[%c0_7, %c0_8] : memref<32x128xf32, #tpu.memory_space<vmem>>, vector<32x128xf32>
    tpu.vector_store %arg5[%c0_7, %c0_8], %11 {strides = array<i32>} : memref<32x128xf32, #tpu.memory_space<vmem>>, vector<32x128xf32>,
    return
  }
  func.func @transform_0(%arg0: i32) -> (i32, i32) {
    %c0_i32 = arith.constant 0 : i32
    %c0_i32_0 = arith.constant 0 : i32
    return %c0_i32, %arg0 : i32, i32
  }
  func.func @transform_1(%arg0: i32) -> (i32, i32) {
    %c0_i32 = arith.constant 0 : i32
    %c0_i32_0 = arith.constant 0 : i32
    %c0_i32_1 = arith.constant 0 : i32
    return %c0_i32, %c0_i32_0 : i32, i32
  }
  func.func @transform_2(%arg0: i32) -> (i32, i32) {
    %c0_i32 = arith.constant 0 : i32
    %c0_i32_0 = arith.constant 0 : i32
    %c0_i32_1 = arith.constant 0 : i32
    return %c0_i32, %c0_i32_0 : i32, i32
  }
  func.func @transform_3(%arg0: i32) -> i32 {
    %c0_i32 = arith.constant 0 : i32
    %c0_i32_0 = arith.constant 0 : i32
    return %c0_i32 : i32
  }
  func.func @transform_4(%arg0: i32) -> (i32, i32) {
    %c0_i32 = arith.constant 0 : i32
    %c0_i32_0 = arith.constant 0 : i32
    return %c0_i32, %arg0 : i32, i32
  }
}

module attributes {stable_mosaic.version = 11 : i64} {
  func.func @_conv_kernel(%arg0: i32, %arg1: memref<144x128xbf16, #tpu.memory_space<vmem>>, %arg2: memref<32x144xbf16, #tpu.memory_space<vmem>>, %arg3: memref<32x1xf32, #tpu.memory_space<vmem>>, %arg4: memref<1xf32, #tpu.memory_space<smem>>, %arg5: memref<32x128xf32, #tpu.memory_space<vmem>>) attributes {dimension_semantics = [#tpu.dimension_semantics<parallel>], iteration_bounds = array<i64: 1>, scalar_prefetch = 0 : i64, scratch_operands = 0 : i64, tpu.core_type = #tpu.core_type<tc>, window_params = [{transform_indices = @transform_0, window_bounds = array<i64: 144, 128>}, {pipeline_mode = #tpu.pipeline_mode<synchronous>, transform_indices = @transform_1, window_bounds = array<i64: 32, 144>}, {pipeline_mode = #tpu.pipeline_mode<synchronous>, transform_indices = @transform_2, window_bounds = array<i64: 32, 1>}, {transform_indices = @transform_3, window_bounds = array<i64: 1>}, {transform_indices = @transform_4, window_bounds = array<i64: 32, 128>}]} {
    %c0 = arith.constant 0 : index
    %c0_0 = arith.constant 0 : index
    %0 = vector.load %arg2[%c0, %c0_0] : memref<32x144xbf16, #tpu.memory_space<vmem>>, vector<32x144xbf16>
    %c0_1 = arith.constant 0 : index
    %c0_2 = arith.constant 0 : index
    %1 = vector.load %arg1[%c0_1, %c0_2] : memref<144x128xbf16, #tpu.memory_space<vmem>>, vector<144x128xbf16>
    %cst = arith.constant dense<0.000000e+00> : vector<32x128xf32>
    %2 = tpu.matmul %0, %1, %cst {dimension_numbers = #tpu.dot_dimension_numbers<[1], [0], [0], [1], [0, 0, 1, 1], [], []>} : vector<32x144xbf16>, vector<144x128xbf16>, vector<32x128xf32> -> vector<32x128xf32>
    %c0_3 = arith.constant 0 : index
    %c0_4 = arith.constant 0 : index
    %3 = vector.load %arg3[%c0_3, %c0_4] : memref<32x1xf32, #tpu.memory_space<vmem>>, vector<32x1xf32>
    %4 = vector.broadcast %3 : vector<32x1xf32> to vector<32x128xf32>
    %5 = arith.addf %2, %4 : vector<32x128xf32>
    %c0_5 = arith.constant 0 : index
    %6 = memref.load %arg4[%c0_5] : memref<1xf32, #tpu.memory_space<smem>>
    %cst_6 = arith.constant 0.000000e+00 : f32
    %7 = vector.broadcast %cst_6 : f32 to vector<32x128xf32>
    %8 = arith.cmpf oge, %5, %7 : vector<32x128xf32>
    %9 = vector.broadcast %6 : f32 to vector<32x128xf32>
    %10 = arith.mulf %9, %5 : vector<32x128xf32>
    %11 = arith.select %8, %5, %10 : vector<32x128xi1>, vector<32x128xf32>
    %c0_7 = arith.constant 0 : index
    %c0_8 = arith.constant 0 : index
    %12 = vector.load %arg5[%c0_7, %c0_8] : memref<32x128xf32, #tpu.memory_space<vmem>>, vector<32x128xf32>
    tpu.vector_store %arg5[%c0_7, %c0_8], %11 {strides = array<i32>} : memref<32x128xf32, #tpu.memory_space<vmem>>, vector<32x128xf32>,
    return
  }
  func.func @transform_0(%arg0: i32) -> (i32, i32) {
    %c0_i32 = arith.constant 0 : i32
    %c0_i32_0 = arith.constant 0 : i32
    return %c0_i32, %arg0 : i32, i32
  }
  func.func @transform_1(%arg0: i32) -> (i32, i32) {
    %c0_i32 = arith.constant 0 : i32
    %c0_i32_0 = arith.constant 0 : i32
    %c0_i32_1 = arith.constant 0 : i32
    return %c0_i32, %c0_i32_0 : i32, i32
  }
  func.func @transform_2(%arg0: i32) -> (i32, i32) {
    %c0_i32 = arith.constant 0 : i32
    %c0_i32_0 = arith.constant 0 : i32
    %c0_i32_1 = arith.constant 0 : i32
    return %c0_i32, %c0_i32_0 : i32, i32
  }
  func.func @transform_3(%arg0: i32) -> i32 {
    %c0_i32 = arith.constant 0 : i32
    %c0_i32_0 = arith.constant 0 : i32
    return %c0_i32 : i32
  }
  func.func @transform_4(%arg0: i32) -> (i32, i32) {
    %c0_i32 = arith.constant 0 : i32
    %c0_i32_0 = arith.constant 0 : i32
    return %c0_i32, %arg0 : i32, i32
  }
}

module attributes {stable_mosaic.version = 11 : i64} {
  func.func @_conv_add_kernel(%arg0: i32, %arg1: memref<288x128xbf16, #tpu.memory_space<vmem>>, %arg2: memref<32x288xbf16, #tpu.memory_space<vmem>>, %arg3: memref<32x1xf32, #tpu.memory_space<vmem>>, %arg4: memref<1xf32, #tpu.memory_space<smem>>, %arg5: memref<32x128xf32, #tpu.memory_space<vmem>>, %arg6: memref<32x128xf32, #tpu.memory_space<vmem>>, %arg7: memref<32x128xf32, #tpu.memory_space<vmem>>) attributes {dimension_semantics = [#tpu.dimension_semantics<parallel>], iteration_bounds = array<i64: 1>, scalar_prefetch = 0 : i64, scratch_operands = 0 : i64, tpu.core_type = #tpu.core_type<tc>, window_params = [{transform_indices = @transform_0, window_bounds = array<i64: 288, 128>}, {pipeline_mode = #tpu.pipeline_mode<synchronous>, transform_indices = @transform_1, window_bounds = array<i64: 32, 288>}, {pipeline_mode = #tpu.pipeline_mode<synchronous>, transform_indices = @transform_2, window_bounds = array<i64: 32, 1>}, {transform_indices = @transform_3, window_bounds = array<i64: 1>}, {transform_indices = @transform_4, window_bounds = array<i64: 32, 128>}, {transform_indices = @transform_5, window_bounds = array<i64: 32, 128>}, {transform_indices = @transform_6, window_bounds = array<i64: 32, 128>}]} {
    %c0 = arith.constant 0 : index
    %c0_0 = arith.constant 0 : index
    %0 = vector.load %arg2[%c0, %c0_0] : memref<32x288xbf16, #tpu.memory_space<vmem>>, vector<32x288xbf16>
    %c0_1 = arith.constant 0 : index
    %c0_2 = arith.constant 0 : index
    %1 = vector.load %arg1[%c0_1, %c0_2] : memref<288x128xbf16, #tpu.memory_space<vmem>>, vector<288x128xbf16>
    %cst = arith.constant dense<0.000000e+00> : vector<32x128xf32>
    %2 = tpu.matmul %0, %1, %cst {dimension_numbers = #tpu.dot_dimension_numbers<[1], [0], [0], [1], [0, 0, 1, 1], [], []>} : vector<32x288xbf16>, vector<288x128xbf16>, vector<32x128xf32> -> vector<32x128xf32>
    %c0_3 = arith.constant 0 : index
    %c0_4 = arith.constant 0 : index
    %3 = vector.load %arg3[%c0_3, %c0_4] : memref<32x1xf32, #tpu.memory_space<vmem>>, vector<32x1xf32>
    %4 = vector.broadcast %3 : vector<32x1xf32> to vector<32x128xf32>
    %5 = arith.addf %2, %4 : vector<32x128xf32>
    %c0_5 = arith.constant 0 : index
    %6 = memref.load %arg4[%c0_5] : memref<1xf32, #tpu.memory_space<smem>>
    %cst_6 = arith.constant 0.000000e+00 : f32
    %7 = vector.broadcast %cst_6 : f32 to vector<32x128xf32>
    %8 = arith.cmpf oge, %5, %7 : vector<32x128xf32>
    %9 = vector.broadcast %6 : f32 to vector<32x128xf32>
    %10 = arith.mulf %9, %5 : vector<32x128xf32>
    %11 = arith.select %8, %5, %10 : vector<32x128xi1>, vector<32x128xf32>
    %c0_7 = arith.constant 0 : index
    %c0_8 = arith.constant 0 : index
    %12 = vector.load %arg6[%c0_7, %c0_8] : memref<32x128xf32, #tpu.memory_space<vmem>>, vector<32x128xf32>
    tpu.vector_store %arg6[%c0_7, %c0_8], %11 {strides = array<i32>} : memref<32x128xf32, #tpu.memory_space<vmem>>, vector<32x128xf32>,
    %c0_9 = arith.constant 0 : index
    %c0_10 = arith.constant 0 : index
    %13 = vector.load %arg5[%c0_9, %c0_10] : memref<32x128xf32, #tpu.memory_space<vmem>>, vector<32x128xf32>
    %14 = arith.addf %11, %13 : vector<32x128xf32>
    %c0_11 = arith.constant 0 : index
    %c0_12 = arith.constant 0 : index
    %15 = vector.load %arg7[%c0_11, %c0_12] : memref<32x128xf32, #tpu.memory_space<vmem>>, vector<32x128xf32>
    tpu.vector_store %arg7[%c0_11, %c0_12], %14 {strides = array<i32>} : memref<32x128xf32, #tpu.memory_space<vmem>>, vector<32x128xf32>,
    return
  }
  func.func @transform_0(%arg0: i32) -> (i32, i32) {
    %c0_i32 = arith.constant 0 : i32
    %c0_i32_0 = arith.constant 0 : i32
    return %c0_i32, %arg0 : i32, i32
  }
  func.func @transform_1(%arg0: i32) -> (i32, i32) {
    %c0_i32 = arith.constant 0 : i32
    %c0_i32_0 = arith.constant 0 : i32
    %c0_i32_1 = arith.constant 0 : i32
    return %c0_i32, %c0_i32_0 : i32, i32
  }
  func.func @transform_2(%arg0: i32) -> (i32, i32) {
    %c0_i32 = arith.constant 0 : i32
    %c0_i32_0 = arith.constant 0 : i32
    %c0_i32_1 = arith.constant 0 : i32
    return %c0_i32, %c0_i32_0 : i32, i32
  }
  func.func @transform_3(%arg0: i32) -> i32 {
    %c0_i32 = arith.constant 0 : i32
    %c0_i32_0 = arith.constant 0 : i32
    return %c0_i32 : i32
  }
  func.func @transform_4(%arg0: i32) -> (i32, i32) {
    %c0_i32 = arith.constant 0 : i32
    %c0_i32_0 = arith.constant 0 : i32
    return %c0_i32, %arg0 : i32, i32
  }
  func.func @transform_5(%arg0: i32) -> (i32, i32) {
    %c0_i32 = arith.constant 0 : i32
    %c0_i32_0 = arith.constant 0 : i32
    return %c0_i32, %arg0 : i32, i32
  }
  func.func @transform_6(%arg0: i32) -> (i32, i32) {
    %c0_i32 = arith.constant 0 : i32
    %c0_i32_0 = arith.constant 0 : i32
    return %c0_i32, %arg0 : i32, i32
  }
}

</mosaic_0001>

<llo_original>
// kernel: _lambda_.13
$region0: #{_lambda_.13}
  #allocation0 [shape = 'u32[]', space=smem, size = 0x4, offset = 0x4, fixed_abs, tag = 'smem constant byte address 0x4 - core index']
  #allocation1 [shape = 'u32[72,128]{1,0:T(1,128)}', space=vmem, size = 0x9000, scoped, tag = 'internal scratch']
  #allocation2 [shape = 'f32[1]{0:T(128)S(6)}', space=smem, size = 0x200, scoped, tag = 'scoped memory for _lambda_.13']
  %s0 = inlined_call_operand.vmem [shape: bf16[48,128], index: 0, kind: input, shape index: {}]
  %s1 = inlined_call_operand.vmem [shape: bf16[8,48], index: 1, kind: input, shape index: {}]
  %s2 = inlined_call_operand.vmem [shape: f32[8,1], index: 2, kind: input, shape index: {}]
  %s3 = inlined_call_operand.<no memory space> [shape: f32[1], index: 3, kind: input, shape index: {}]
  %s4 = inlined_call_operand.vmem [shape: f32[8,128], index: 4, kind: output, shape index: {}]
  %s5 = sld [smem:[#allocation0]]
  $region26: #{_lambda_.13} parent=0
    _
  %s7 = ssub.s32 1, %s5
  %s8 = scalar_select 0, %s7, %s5
  %9 = sst [smem:[#allocation2]] %s3
  // Predicated region
  $region2: #{_lambda_.13} parent=0 // pred_check
    _
  $region3: #{_lambda_.13} parent=0 // pred_check_branch
    %11 = sbr.rel (0) target = $region5
  $region4: #{_lambda_.13} parent=0 // pred_region
    _
  $region5: #{_lambda_.13} parent=0 // pred_fallthru
    _
  // Predicated region
  $region6: #{_lambda_.13} parent=0 // pred_check
    _
  $region7: #{_lambda_.13} parent=0 // pred_check_branch
    %13 = sbr.rel (0) target = $region9
  $region8: #{_lambda_.13} parent=0 // pred_region
    _
  $region9: #{_lambda_.13} parent=0 // pred_fallthru
    _
  // Predicated region
  $region10: #{_lambda_.13} parent=0 // pred_check
    _
  $region11: #{_lambda_.13} parent=0 // pred_check_branch
    %15 = sbr.rel (0) target = $region13
  $region12: #{_lambda_.13} parent=0 // pred_region
    _
  $region13: #{_lambda_.13} parent=0 // pred_fallthru
    _
  // Predicated region
  $region14: #{_lambda_.13} parent=0 // pred_check
    _
  $region15: #{_lambda_.13} parent=0 // pred_check_branch
    %17 = sbr.rel (0) target = $region17
  $region16: #{_lambda_.13} parent=0 // pred_region
    _
  $region17: #{_lambda_.13} parent=0 // pred_fallthru
    _
  %v19 = vld [vmem:[%s1] sm:$0xf]
  %v20 = vld [vmem:[%s0] sm:$0xf]
  %v21 = vld [vmem:[%s0 + $0x4] sm:$0xf]
  %v22 = vld [vmem:[%s0 + $0x8] sm:$0xf]
  %v23 = vld [vmem:[%s0 + $0xc] sm:$0xf]
  %v24 = vld [vmem:[%s0 + $0x10] sm:$0xf]
  %v25 = vld [vmem:[%s0 + $0x14] sm:$0xf]
  %v26 = vld [vmem:[%s2] sm:$0xff]
  %28 = vset.pattern.permute.xlu0 0
  %29 = vperm.xlu0 %28, %v26
  %v30 = vpop.permute.xlu0 %29
  %v38 = vunpack.c.l.b16 %v20
  %v39 = vunpack.c.l.b16 %v21
  %v40 = vunpack.c.l.b16 %v22
  %v41 = vunpack.c.l.b16 %v23
  %v42 = vunpack.c.l.b16 %v24
  %v43 = vunpack.c.l.b16 %v25
  %v44 = vpack.c.b16 %v39, %v38
  %v45 = vpack.c.b16 %v41, %v40
  %v46 = vpack.c.b16 %v43, %v42
  %vm50 = vcmask 392192
  %v52 = vsel %vm50, %v19, 0
  %54 = vmatpush.bf16.msra.mxu0 0
  %55 = vmatpush.bf16.msra.mxu0 0
  %56 = vmatpush.bf16.msra.mxu0 0
  %57 = vmatpush.bf16.msra.mxu0 0
  %58 = vmatpush.bf16.msra.mxu0 0
  %59 = vmatpush.bf16.msra.mxu0 %v46
  %60 = vmatpush.bf16.msra.mxu0 %v45
  %61 = vmatpush.bf16.msra.mxu0 %v44
  %62 = vmatmul.bf16.gmra.mxu0 %v52
  %v63 = vpop.f32.mrf.mxu0
  %v64 = vadd.f32 %v30, %v63
  %v65 = vpop.f32.mrf.mxu0
  %66 = vdwg.mxu0
  %s67 = sld [smem:[#allocation2]]
  %vm68 = vcmp.ge.f32.partialorder %v64, 0.0
  %v69 = vstv %s67
  %v70 = vmul.f32 %v69, %v64
  %v71 = vsel %vm68, %v64, %v70
  %72 = vst [vmem:[%s4] sm:$0xff] %v71
  // Predicated region
  $region18: #{_lambda_.13} parent=0 // pred_check
    _
  $region19: #{_lambda_.13} parent=0 // pred_check_branch
    %74 = sbr.rel (0) target = $region21
  $region20: #{_lambda_.13} parent=0 // pred_region
    _
  $region21: #{_lambda_.13} parent=0 // pred_fallthru
    _
  // Predicated region
  $region22: #{_lambda_.13} parent=0 // pred_check
    _
  $region23: #{_lambda_.13} parent=0 // pred_check_branch
    %76 = sbr.rel (0) target = $region25
  $region24: #{_lambda_.13} parent=0 // pred_region
    _
  $region25: #{_lambda_.13} parent=0 // pred_fallthru
    _

// kernel: _lambda_.12
$region0: #{_lambda_.12}
  #allocation0 [shape = 'u32[]', space=smem, size = 0x4, offset = 0x4, fixed_abs, tag = 'smem constant byte address 0x4 - core index']
  #allocation1 [shape = 'u32[72,128]{1,0:T(1,128)}', space=vmem, size = 0x9000, scoped, tag = 'internal scratch']
  #allocation2 [shape = 'f32[1]{0:T(128)S(6)}', space=smem, size = 0x200, scoped, tag = 'scoped memory for _lambda_.12']
  %s0 = inlined_call_operand.vmem [shape: bf16[48,128], index: 0, kind: input, shape index: {}]
  %s1 = inlined_call_operand.vmem [shape: bf16[8,48], index: 1, kind: input, shape index: {}]
  %s2 = inlined_call_operand.vmem [shape: f32[8,1], index: 2, kind: input, shape index: {}]
  %s3 = inlined_call_operand.<no memory space> [shape: f32[1], index: 3, kind: input, shape index: {}]
  %s4 = inlined_call_operand.vmem [shape: f32[8,128], index: 4, kind: output, shape index: {}]
  %s5 = sld [smem:[#allocation0]]
  $region26: #{_lambda_.12} parent=0
    _
  %s7 = ssub.s32 1, %s5
  %s8 = scalar_select 0, %s7, %s5
  %9 = sst [smem:[#allocation2]] %s3
  // Predicated region
  $region2: #{_lambda_.12} parent=0 // pred_check
    _
  $region3: #{_lambda_.12} parent=0 // pred_check_branch
    %11 = sbr.rel (0) target = $region5
  $region4: #{_lambda_.12} parent=0 // pred_region
    _
  $region5: #{_lambda_.12} parent=0 // pred_fallthru
    _
  // Predicated region
  $region6: #{_lambda_.12} parent=0 // pred_check
    _
  $region7: #{_lambda_.12} parent=0 // pred_check_branch
    %13 = sbr.rel (0) target = $region9
  $region8: #{_lambda_.12} parent=0 // pred_region
    _
  $region9: #{_lambda_.12} parent=0 // pred_fallthru
    _
  // Predicated region
  $region10: #{_lambda_.12} parent=0 // pred_check
    _
  $region11: #{_lambda_.12} parent=0 // pred_check_branch
    %15 = sbr.rel (0) target = $region13
  $region12: #{_lambda_.12} parent=0 // pred_region
    _
  $region13: #{_lambda_.12} parent=0 // pred_fallthru
    _
  // Predicated region
  $region14: #{_lambda_.12} parent=0 // pred_check
    _
  $region15: #{_lambda_.12} parent=0 // pred_check_branch
    %17 = sbr.rel (0) target = $region17
  $region16: #{_lambda_.12} parent=0 // pred_region
    _
  $region17: #{_lambda_.12} parent=0 // pred_fallthru
    _
  %v19 = vld [vmem:[%s1] sm:$0xf]
  %v20 = vld [vmem:[%s0] sm:$0xf]
  %v21 = vld [vmem:[%s0 + $0x4] sm:$0xf]
  %v22 = vld [vmem:[%s0 + $0x8] sm:$0xf]
  %v23 = vld [vmem:[%s0 + $0xc] sm:$0xf]
  %v24 = vld [vmem:[%s0 + $0x10] sm:$0xf]
  %v25 = vld [vmem:[%s0 + $0x14] sm:$0xf]
  %v26 = vld [vmem:[%s2] sm:$0xff]
  %28 = vset.pattern.permute.xlu0 0
  %29 = vperm.xlu0 %28, %v26
  %v30 = vpop.permute.xlu0 %29
  %v38 = vunpack.c.l.b16 %v20
  %v39 = vunpack.c.l.b16 %v21
  %v40 = vunpack.c.l.b16 %v22
  %v41 = vunpack.c.l.b16 %v23
  %v42 = vunpack.c.l.b16 %v24
  %v43 = vunpack.c.l.b16 %v25
  %v44 = vpack.c.b16 %v39, %v38
  %v45 = vpack.c.b16 %v41, %v40
  %v46 = vpack.c.b16 %v43, %v42
  %vm50 = vcmask 392192
  %v52 = vsel %vm50, %v19, 0
  %54 = vmatpush.bf16.msra.mxu0 0
  %55 = vmatpush.bf16.msra.mxu0 0
  %56 = vmatpush.bf16.msra.mxu0 0
  %57 = vmatpush.bf16.msra.mxu0 0
  %58 = vmatpush.bf16.msra.mxu0 0
  %59 = vmatpush.bf16.msra.mxu0 %v46
  %60 = vmatpush.bf16.msra.mxu0 %v45
  %61 = vmatpush.bf16.msra.mxu0 %v44
  %62 = vmatmul.bf16.gmra.mxu0 %v52
  %v63 = vpop.f32.mrf.mxu0
  %v64 = vadd.f32 %v30, %v63
  %v65 = vpop.f32.mrf.mxu0
  %66 = vdwg.mxu0
  %67 = vst [vmem:[%s4] sm:$0xff] %v64
  // Predicated region
  $region18: #{_lambda_.12} parent=0 // pred_check
    _
  $region19: #{_lambda_.12} parent=0 // pred_check_branch
    %69 = sbr.rel (0) target = $region21
  $region20: #{_lambda_.12} parent=0 // pred_region
    _
  $region21: #{_lambda_.12} parent=0 // pred_fallthru
    _
  // Predicated region
  $region22: #{_lambda_.12} parent=0 // pred_check
    _
  $region23: #{_lambda_.12} parent=0 // pred_check_branch
    %71 = sbr.rel (0) target = $region25
  $region24: #{_lambda_.12} parent=0 // pred_region
    _
  $region25: #{_lambda_.12} parent=0 // pred_fallthru
    _

// kernel: _lambda_.14
$region0: #{_lambda_.14}
  #allocation0 [shape = 'u32[]', space=smem, size = 0x4, offset = 0x4, fixed_abs, tag = 'smem constant byte address 0x4 - core index']
  #allocation1 [shape = 'u32[72,128]{1,0:T(1,128)}', space=vmem, size = 0x9000, scoped, tag = 'internal scratch']
  #allocation2 [shape = 'f32[1]{0:T(128)S(6)}', space=smem, size = 0x200, scoped, tag = 'scoped memory for _lambda_.14']
  %s0 = inlined_call_operand.vmem [shape: bf16[80,128], index: 0, kind: input, shape index: {}]
  %s1 = inlined_call_operand.vmem [shape: bf16[8,80], index: 1, kind: input, shape index: {}]
  %s2 = inlined_call_operand.vmem [shape: f32[8,1], index: 2, kind: input, shape index: {}]
  %s3 = inlined_call_operand.<no memory space> [shape: f32[1], index: 3, kind: input, shape index: {}]
  %s4 = inlined_call_operand.vmem [shape: f32[8,128], index: 4, kind: output, shape index: {}]
  %s5 = sld [smem:[#allocation0]]
  $region26: #{_lambda_.14} parent=0
    _
  %s7 = ssub.s32 1, %s5
  %s8 = scalar_select 0, %s7, %s5
  %9 = sst [smem:[#allocation2]] %s3
  // Predicated region
  $region2: #{_lambda_.14} parent=0 // pred_check
    _
  $region3: #{_lambda_.14} parent=0 // pred_check_branch
    %11 = sbr.rel (0) target = $region5
  $region4: #{_lambda_.14} parent=0 // pred_region
    _
  $region5: #{_lambda_.14} parent=0 // pred_fallthru
    _
  // Predicated region
  $region6: #{_lambda_.14} parent=0 // pred_check
    _
  $region7: #{_lambda_.14} parent=0 // pred_check_branch
    %13 = sbr.rel (0) target = $region9
  $region8: #{_lambda_.14} parent=0 // pred_region
    _
  $region9: #{_lambda_.14} parent=0 // pred_fallthru
    _
  // Predicated region
  $region10: #{_lambda_.14} parent=0 // pred_check
    _
  $region11: #{_lambda_.14} parent=0 // pred_check_branch
    %15 = sbr.rel (0) target = $region13
  $region12: #{_lambda_.14} parent=0 // pred_region
    _
  $region13: #{_lambda_.14} parent=0 // pred_fallthru
    _
  // Predicated region
  $region14: #{_lambda_.14} parent=0 // pred_check
    _
  $region15: #{_lambda_.14} parent=0 // pred_check_branch
    %17 = sbr.rel (0) target = $region17
  $region16: #{_lambda_.14} parent=0 // pred_region
    _
  $region17: #{_lambda_.14} parent=0 // pred_fallthru
    _
  %v19 = vld [vmem:[%s1] sm:$0xf]
  %v20 = vld [vmem:[%s0] sm:$0xf]
  %v21 = vld [vmem:[%s0 + $0x4] sm:$0xf]
  %v22 = vld [vmem:[%s0 + $0x8] sm:$0xf]
  %v23 = vld [vmem:[%s0 + $0xc] sm:$0xf]
  %v24 = vld [vmem:[%s0 + $0x10] sm:$0xf]
  %v25 = vld [vmem:[%s0 + $0x14] sm:$0xf]
  %v26 = vld [vmem:[%s0 + $0x18] sm:$0xf]
  %v27 = vld [vmem:[%s0 + $0x1c] sm:$0xf]
  %v28 = vld [vmem:[%s0 + $0x20] sm:$0xf]
  %v29 = vld [vmem:[%s0 + $0x24] sm:$0xf]
  %v30 = vld [vmem:[%s2] sm:$0xff]
  %32 = vset.pattern.permute.xlu0 0
  %33 = vperm.xlu0 %32, %v30
  %v34 = vpop.permute.xlu0 %33
  %v46 = vunpack.c.l.b16 %v20
  %v47 = vunpack.c.l.b16 %v21
  %v48 = vunpack.c.l.b16 %v22
  %v49 = vunpack.c.l.b16 %v23
  %v50 = vunpack.c.l.b16 %v24
  %v51 = vunpack.c.l.b16 %v25
  %v52 = vunpack.c.l.b16 %v26
  %v53 = vunpack.c.l.b16 %v27
  %v54 = vunpack.c.l.b16 %v28
  %v55 = vunpack.c.l.b16 %v29
  %v56 = vpack.c.b16 %v47, %v46
  %v57 = vpack.c.b16 %v49, %v48
  %v58 = vpack.c.b16 %v51, %v50
  %v59 = vpack.c.b16 %v53, %v52
  %v60 = vpack.c.b16 %v55, %v54
  %vm66 = vcmask 654336
  %v68 = vsel %vm66, %v19, 0
  %70 = vmatpush.bf16.msra.mxu0 0
  %71 = vmatpush.bf16.msra.mxu0 0
  %72 = vmatpush.bf16.msra.mxu0 0
  %73 = vmatpush.bf16.msra.mxu0 %v60
  %74 = vmatpush.bf16.msra.mxu0 %v59
  %75 = vmatpush.bf16.msra.mxu0 %v58
  %76 = vmatpush.bf16.msra.mxu0 %v57
  %77 = vmatpush.bf16.msra.mxu0 %v56
  %78 = vmatmul.bf16.gmra.mxu0 %v68
  %v79 = vpop.f32.mrf.mxu0
  %v80 = vadd.f32 %v34, %v79
  %v81 = vpop.f32.mrf.mxu0
  %82 = vdwg.mxu0
  %s83 = sld [smem:[#allocation2]]
  %vm84 = vcmp.ge.f32.partialorder %v80, 0.0
  %v85 = vstv %s83
  %v86 = vmul.f32 %v85, %v80
  %v87 = vsel %vm84, %v80, %v86
  %88 = vst [vmem:[%s4] sm:$0xff] %v87
  // Predicated region
  $region18: #{_lambda_.14} parent=0 // pred_check
    _
  $region19: #{_lambda_.14} parent=0 // pred_check_branch
    %90 = sbr.rel (0) target = $region21
  $region20: #{_lambda_.14} parent=0 // pred_region
    _
  $region21: #{_lambda_.14} parent=0 // pred_fallthru
    _
  // Predicated region
  $region22: #{_lambda_.14} parent=0 // pred_check
    _
  $region23: #{_lambda_.14} parent=0 // pred_check_branch
    %92 = sbr.rel (0) target = $region25
  $region24: #{_lambda_.14} parent=0 // pred_region
    _
  $region25: #{_lambda_.14} parent=0 // pred_fallthru
    _

// kernel: _lambda_.15
$region0: #{_lambda_.15}
  #allocation0 [shape = 'u32[]', space=smem, size = 0x4, offset = 0x4, fixed_abs, tag = 'smem constant byte address 0x4 - core index']
  #allocation1 [shape = 'u32[72,128]{1,0:T(1,128)}', space=vmem, size = 0x9000, scoped, tag = 'internal scratch']
  #allocation2 [shape = 'f32[1]{0:T(128)S(6)}', space=smem, size = 0x200, scoped, tag = 'scoped memory for _lambda_.15']
  %s0 = inlined_call_operand.vmem [shape: bf16[80,128], index: 0, kind: input, shape index: {}]
  %s1 = inlined_call_operand.vmem [shape: bf16[8,80], index: 1, kind: input, shape index: {}]
  %s2 = inlined_call_operand.vmem [shape: f32[8,1], index: 2, kind: input, shape index: {}]
  %s3 = inlined_call_operand.<no memory space> [shape: f32[1], index: 3, kind: input, shape index: {}]
  %s4 = inlined_call_operand.vmem [shape: f32[8,128], index: 4, kind: input, shape index: {}]
  %s5 = inlined_call_operand.vmem [shape: f32[8,128], index: 5, kind: output, shape index: {0}]
  %s6 = inlined_call_operand.vmem [shape: f32[8,128], index: 6, kind: output, shape index: {1}]
  %7 = xla_tuple %s5, %s6
  %s8 = sld [smem:[#allocation0]]
  $region38: #{_lambda_.15} parent=0
    _
  %s10 = ssub.s32 1, %s8
  %s11 = scalar_select 0, %s10, %s8
  %12 = sst [smem:[#allocation2]] %s3
  // Predicated region
  $region2: #{_lambda_.15} parent=0 // pred_check
    _
  $region3: #{_lambda_.15} parent=0 // pred_check_branch
    %14 = sbr.rel (0) target = $region5
  $region4: #{_lambda_.15} parent=0 // pred_region
    _
  $region5: #{_lambda_.15} parent=0 // pred_fallthru
    _
  // Predicated region
  $region6: #{_lambda_.15} parent=0 // pred_check
    _
  $region7: #{_lambda_.15} parent=0 // pred_check_branch
    %16 = sbr.rel (0) target = $region9
  $region8: #{_lambda_.15} parent=0 // pred_region
    _
  $region9: #{_lambda_.15} parent=0 // pred_fallthru
    _
  // Predicated region
  $region10: #{_lambda_.15} parent=0 // pred_check
    _
  $region11: #{_lambda_.15} parent=0 // pred_check_branch
    %18 = sbr.rel (0) target = $region13
  $region12: #{_lambda_.15} parent=0 // pred_region
    _
  $region13: #{_lambda_.15} parent=0 // pred_fallthru
    _
  // Predicated region
  $region14: #{_lambda_.15} parent=0 // pred_check
    _
  $region15: #{_lambda_.15} parent=0 // pred_check_branch
    %20 = sbr.rel (0) target = $region17
  $region16: #{_lambda_.15} parent=0 // pred_region
    _
  $region17: #{_lambda_.15} parent=0 // pred_fallthru
    _
  // Predicated region
  $region18: #{_lambda_.15} parent=0 // pred_check
    _
  $region19: #{_lambda_.15} parent=0 // pred_check_branch
    %22 = sbr.rel (0) target = $region21
  $region20: #{_lambda_.15} parent=0 // pred_region
    _
  $region21: #{_lambda_.15} parent=0 // pred_fallthru
    _
  %v24 = vld [vmem:[%s1] sm:$0xf]
  %v25 = vld [vmem:[%s0] sm:$0xf]
  %v26 = vld [vmem:[%s0 + $0x4] sm:$0xf]
  %v27 = vld [vmem:[%s0 + $0x8] sm:$0xf]
  %v28 = vld [vmem:[%s0 + $0xc] sm:$0xf]
  %v29 = vld [vmem:[%s0 + $0x10] sm:$0xf]
  %v30 = vld [vmem:[%s0 + $0x14] sm:$0xf]
  %v31 = vld [vmem:[%s0 + $0x18] sm:$0xf]
  %v32 = vld [vmem:[%s0 + $0x1c] sm:$0xf]
  %v33 = vld [vmem:[%s0 + $0x20] sm:$0xf]
  %v34 = vld [vmem:[%s0 + $0x24] sm:$0xf]
  %v35 = vld [vmem:[%s2] sm:$0xff]
  %37 = vset.pattern.permute.xlu0 0
  %38 = vperm.xlu0 %37, %v35
  %v39 = vpop.permute.xlu0 %38
  %v51 = vunpack.c.l.b16 %v25
  %v52 = vunpack.c.l.b16 %v26
  %v53 = vunpack.c.l.b16 %v27
  %v54 = vunpack.c.l.b16 %v28
  %v55 = vunpack.c.l.b16 %v29
  %v56 = vunpack.c.l.b16 %v30
  %v57 = vunpack.c.l.b16 %v31
  %v58 = vunpack.c.l.b16 %v32
  %v59 = vunpack.c.l.b16 %v33
  %v60 = vunpack.c.l.b16 %v34
  %v61 = vpack.c.b16 %v52, %v51
  %v62 = vpack.c.b16 %v54, %v53
  %v63 = vpack.c.b16 %v56, %v55
  %v64 = vpack.c.b16 %v58, %v57
  %v65 = vpack.c.b16 %v60, %v59
  %vm71 = vcmask 654336
  %v73 = vsel %vm71, %v24, 0
  %75 = vmatpush.bf16.msra.mxu0 0
  %76 = vmatpush.bf16.msra.mxu0 0
  %77 = vmatpush.bf16.msra.mxu0 0
  %78 = vmatpush.bf16.msra.mxu0 %v65
  %79 = vmatpush.bf16.msra.mxu0 %v64
  %80 = vmatpush.bf16.msra.mxu0 %v63
  %81 = vmatpush.bf16.msra.mxu0 %v62
  %82 = vmatpush.bf16.msra.mxu0 %v61
  %83 = vmatmul.bf16.gmra.mxu0 %v73
  %v84 = vpop.f32.mrf.mxu0
  %v85 = vadd.f32 %v39, %v84
  %v86 = vpop.f32.mrf.mxu0
  %87 = vdwg.mxu0
  %s88 = sld [smem:[#allocation2]]
  %vm89 = vcmp.ge.f32.partialorder %v85, 0.0
  %v90 = vstv %s88
  %v91 = vmul.f32 %v90, %v85
  %v92 = vsel %vm89, %v85, %v91
  %93 = vst [vmem:[%s5] sm:$0xff] %v92
  %v94 = vld [vmem:[%s4] sm:$0xff]
  %v95 = vadd.f32 %v92, %v94
  %96 = vst [vmem:[%s6] sm:$0xff] %v95
  // Predicated region
  $region22: #{_lambda_.15} parent=0 // pred_check
    _
  $region23: #{_lambda_.15} parent=0 // pred_check_branch
    %98 = sbr.rel (0) target = $region25
  $region24: #{_lambda_.15} parent=0 // pred_region
    _
  $region25: #{_lambda_.15} parent=0 // pred_fallthru
    _
  // Predicated region
  $region26: #{_lambda_.15} parent=0 // pred_check
    _
  $region27: #{_lambda_.15} parent=0 // pred_check_branch
    %100 = sbr.rel (0) target = $region29
  $region28: #{_lambda_.15} parent=0 // pred_region
    _
  $region29: #{_lambda_.15} parent=0 // pred_fallthru
    _
  // Predicated region
  $region30: #{_lambda_.15} parent=0 // pred_check
    _
  $region31: #{_lambda_.15} parent=0 // pred_check_branch
    %102 = sbr.rel (0) target = $region33
  $region32: #{_lambda_.15} parent=0 // pred_region
    _
  $region33: #{_lambda_.15} parent=0 // pred_fallthru
    _
  // Predicated region
  $region34: #{_lambda_.15} parent=0 // pred_check
    _
  $region35: #{_lambda_.15} parent=0 // pred_check_branch
    %104 = sbr.rel (0) target = $region37
  $region36: #{_lambda_.15} parent=0 // pred_region
    _
  $region37: #{_lambda_.15} parent=0 // pred_fallthru
    _

// kernel: _lambda_.17
$region0: #{_lambda_.17}
  #allocation0 [shape = 'u32[]', space=smem, size = 0x4, offset = 0x4, fixed_abs, tag = 'smem constant byte address 0x4 - core index']
  #allocation1 [shape = 'u32[72,128]{1,0:T(1,128)}', space=vmem, size = 0x9000, scoped, tag = 'internal scratch']
  #allocation2 [shape = 'f32[1]{0:T(128)S(6)}', space=smem, size = 0x200, scoped, tag = 'scoped memory for _lambda_.17']
  %s0 = inlined_call_operand.vmem [shape: bf16[80,128], index: 0, kind: input, shape index: {}]
  %s1 = inlined_call_operand.vmem [shape: bf16[16,80], index: 1, kind: input, shape index: {}]
  %s2 = inlined_call_operand.vmem [shape: f32[16,1], index: 2, kind: input, shape index: {}]
  %s3 = inlined_call_operand.<no memory space> [shape: f32[1], index: 3, kind: input, shape index: {}]
  %s4 = inlined_call_operand.vmem [shape: f32[16,128], index: 4, kind: output, shape index: {}]
  %s5 = sld [smem:[#allocation0]]
  $region26: #{_lambda_.17} parent=0
    _
  %s7 = ssub.s32 1, %s5
  %s8 = scalar_select 0, %s7, %s5
  %9 = sst [smem:[#allocation2]] %s3
  // Predicated region
  $region2: #{_lambda_.17} parent=0 // pred_check
    _
  $region3: #{_lambda_.17} parent=0 // pred_check_branch
    %11 = sbr.rel (0) target = $region5
  $region4: #{_lambda_.17} parent=0 // pred_region
    _
  $region5: #{_lambda_.17} parent=0 // pred_fallthru
    _
  // Predicated region
  $region6: #{_lambda_.17} parent=0 // pred_check
    _
  $region7: #{_lambda_.17} parent=0 // pred_check_branch
    %13 = sbr.rel (0) target = $region9
  $region8: #{_lambda_.17} parent=0 // pred_region
    _
  $region9: #{_lambda_.17} parent=0 // pred_fallthru
    _
  // Predicated region
  $region10: #{_lambda_.17} parent=0 // pred_check
    _
  $region11: #{_lambda_.17} parent=0 // pred_check_branch
    %15 = sbr.rel (0) target = $region13
  $region12: #{_lambda_.17} parent=0 // pred_region
    _
  $region13: #{_lambda_.17} parent=0 // pred_fallthru
    _
  // Predicated region
  $region14: #{_lambda_.17} parent=0 // pred_check
    _
  $region15: #{_lambda_.17} parent=0 // pred_check_branch
    %17 = sbr.rel (0) target = $region17
  $region16: #{_lambda_.17} parent=0 // pred_region
    _
  $region17: #{_lambda_.17} parent=0 // pred_fallthru
    _
  %v19 = vld [vmem:[%s1] sm:$0xf]
  %v20 = vld [vmem:[%s1 + $0x4] sm:$0xf]
  %v21 = vld [vmem:[%s0] sm:$0xf]
  %v22 = vld [vmem:[%s0 + $0x4] sm:$0xf]
  %v23 = vld [vmem:[%s0 + $0x8] sm:$0xf]
  %v24 = vld [vmem:[%s0 + $0xc] sm:$0xf]
  %v25 = vld [vmem:[%s0 + $0x10] sm:$0xf]
  %v26 = vld [vmem:[%s0 + $0x14] sm:$0xf]
  %v27 = vld [vmem:[%s0 + $0x18] sm:$0xf]
  %v28 = vld [vmem:[%s0 + $0x1c] sm:$0xf]
  %v29 = vld [vmem:[%s0 + $0x20] sm:$0xf]
  %v30 = vld [vmem:[%s0 + $0x24] sm:$0xf]
  %v31 = vld [vmem:[%s2] sm:$0xff]
  %v32 = vld [vmem:[%s2 + $0x8] sm:$0xff]
  %34 = vset.pattern.permute.xlu0 0
  %35 = vperm.xlu0 %34, %v31
  %v36 = vpop.permute.xlu0 %35
  %39 = vset.pattern.permute.xlu0 0
  %40 = vperm.xlu0 %39, %v32
  %v41 = vpop.permute.xlu0 %40
  %v45 = vunpack.c.l.b16 %v19
  %v46 = vunpack.c.l.b16 %v20
  %v47 = vpack.c.b16 %v46, %v45
  %v58 = vunpack.c.l.b16 %v21
  %v59 = vunpack.c.l.b16 %v22
  %v60 = vunpack.c.l.b16 %v23
  %v61 = vunpack.c.l.b16 %v24
  %v62 = vunpack.c.l.b16 %v25
  %v63 = vunpack.c.l.b16 %v26
  %v64 = vunpack.c.l.b16 %v27
  %v65 = vunpack.c.l.b16 %v28
  %v66 = vunpack.c.l.b16 %v29
  %v67 = vunpack.c.l.b16 %v30
  %v68 = vpack.c.b16 %v59, %v58
  %v69 = vpack.c.b16 %v61, %v60
  %v70 = vpack.c.b16 %v63, %v62
  %v71 = vpack.c.b16 %v65, %v64
  %v72 = vpack.c.b16 %v67, %v66
  %vm78 = vcmask 654336
  %v80 = vsel %vm78, %v47, 0
  %82 = vmatpush.bf16.msra.mxu0 0
  %83 = vmatpush.bf16.msra.mxu0 0
  %84 = vmatpush.bf16.msra.mxu0 0
  %85 = vmatpush.bf16.msra.mxu0 %v72
  %86 = vmatpush.bf16.msra.mxu0 %v71
  %87 = vmatpush.bf16.msra.mxu0 %v70
  %88 = vmatpush.bf16.msra.mxu0 %v69
  %89 = vmatpush.bf16.msra.mxu0 %v68
  %90 = vmatmul.bf16.gmra.mxu0 %v80
  %v91 = vpop.f32.mrf.mxu0
  %v92 = vadd.f32 %v36, %v91
  %v93 = vpop.f32.mrf.mxu0
  %v94 = vadd.f32 %v41, %v93
  %95 = vdwg.mxu0
  %s96 = sld [smem:[#allocation2]]
  %vm97 = vcmp.ge.f32.partialorder %v92, 0.0
  %vm98 = vcmp.ge.f32.partialorder %v94, 0.0
  %v99 = vstv %s96
  %v100 = vmul.f32 %v99, %v92
  %v101 = vmul.f32 %v99, %v94
  %v102 = vsel %vm97, %v92, %v100
  %v103 = vsel %vm98, %v94, %v101
  %104 = vst [vmem:[%s4] sm:$0xff] %v102
  %105 = vst [vmem:[%s4 + $0x8] sm:$0xff] %v103
  // Predicated region
  $region18: #{_lambda_.17} parent=0 // pred_check
    _
  $region19: #{_lambda_.17} parent=0 // pred_check_branch
    %107 = sbr.rel (0) target = $region21
  $region20: #{_lambda_.17} parent=0 // pred_region
    _
  $region21: #{_lambda_.17} parent=0 // pred_fallthru
    _
  // Predicated region
  $region22: #{_lambda_.17} parent=0 // pred_check
    _
  $region23: #{_lambda_.17} parent=0 // pred_check_branch
    %109 = sbr.rel (0) target = $region25
  $region24: #{_lambda_.17} parent=0 // pred_region
    _
  $region25: #{_lambda_.17} parent=0 // pred_fallthru
    _

// kernel: _lambda_.16
$region0: #{_lambda_.16}
  #allocation0 [shape = 'u32[]', space=smem, size = 0x4, offset = 0x4, fixed_abs, tag = 'smem constant byte address 0x4 - core index']
  #allocation1 [shape = 'u32[72,128]{1,0:T(1,128)}', space=vmem, size = 0x9000, scoped, tag = 'internal scratch']
  #allocation2 [shape = 'f32[1]{0:T(128)S(6)}', space=smem, size = 0x200, scoped, tag = 'scoped memory for _lambda_.16']
  %s0 = inlined_call_operand.vmem [shape: bf16[80,128], index: 0, kind: input, shape index: {}]
  %s1 = inlined_call_operand.vmem [shape: bf16[16,80], index: 1, kind: input, shape index: {}]
  %s2 = inlined_call_operand.vmem [shape: f32[16,1], index: 2, kind: input, shape index: {}]
  %s3 = inlined_call_operand.<no memory space> [shape: f32[1], index: 3, kind: input, shape index: {}]
  %s4 = inlined_call_operand.vmem [shape: f32[16,128], index: 4, kind: output, shape index: {}]
  %s5 = sld [smem:[#allocation0]]
  $region26: #{_lambda_.16} parent=0
    _
  %s7 = ssub.s32 1, %s5
  %s8 = scalar_select 0, %s7, %s5
  %9 = sst [smem:[#allocation2]] %s3
  // Predicated region
  $region2: #{_lambda_.16} parent=0 // pred_check
    _
  $region3: #{_lambda_.16} parent=0 // pred_check_branch
    %11 = sbr.rel (0) target = $region5
  $region4: #{_lambda_.16} parent=0 // pred_region
    _
  $region5: #{_lambda_.16} parent=0 // pred_fallthru
    _
  // Predicated region
  $region6: #{_lambda_.16} parent=0 // pred_check
    _
  $region7: #{_lambda_.16} parent=0 // pred_check_branch
    %13 = sbr.rel (0) target = $region9
  $region8: #{_lambda_.16} parent=0 // pred_region
    _
  $region9: #{_lambda_.16} parent=0 // pred_fallthru
    _
  // Predicated region
  $region10: #{_lambda_.16} parent=0 // pred_check
    _
  $region11: #{_lambda_.16} parent=0 // pred_check_branch
    %15 = sbr.rel (0) target = $region13
  $region12: #{_lambda_.16} parent=0 // pred_region
    _
  $region13: #{_lambda_.16} parent=0 // pred_fallthru
    _
  // Predicated region
  $region14: #{_lambda_.16} parent=0 // pred_check
    _
  $region15: #{_lambda_.16} parent=0 // pred_check_branch
    %17 = sbr.rel (0) target = $region17
  $region16: #{_lambda_.16} parent=0 // pred_region
    _
  $region17: #{_lambda_.16} parent=0 // pred_fallthru
    _
  %v19 = vld [vmem:[%s1] sm:$0xf]
  %v20 = vld [vmem:[%s1 + $0x4] sm:$0xf]
  %v21 = vld [vmem:[%s0] sm:$0xf]
  %v22 = vld [vmem:[%s0 + $0x4] sm:$0xf]
  %v23 = vld [vmem:[%s0 + $0x8] sm:$0xf]
  %v24 = vld [vmem:[%s0 + $0xc] sm:$0xf]
  %v25 = vld [vmem:[%s0 + $0x10] sm:$0xf]
  %v26 = vld [vmem:[%s0 + $0x14] sm:$0xf]
  %v27 = vld [vmem:[%s0 + $0x18] sm:$0xf]
  %v28 = vld [vmem:[%s0 + $0x1c] sm:$0xf]
  %v29 = vld [vmem:[%s0 + $0x20] sm:$0xf]
  %v30 = vld [vmem:[%s0 + $0x24] sm:$0xf]
  %v31 = vld [vmem:[%s2] sm:$0xff]
  %v32 = vld [vmem:[%s2 + $0x8] sm:$0xff]
  %34 = vset.pattern.permute.xlu0 0
  %35 = vperm.xlu0 %34, %v31
  %v36 = vpop.permute.xlu0 %35
  %39 = vset.pattern.permute.xlu0 0
  %40 = vperm.xlu0 %39, %v32
  %v41 = vpop.permute.xlu0 %40
  %v45 = vunpack.c.l.b16 %v19
  %v46 = vunpack.c.l.b16 %v20
  %v47 = vpack.c.b16 %v46, %v45
  %v58 = vunpack.c.l.b16 %v21
  %v59 = vunpack.c.l.b16 %v22
  %v60 = vunpack.c.l.b16 %v23
  %v61 = vunpack.c.l.b16 %v24
  %v62 = vunpack.c.l.b16 %v25
  %v63 = vunpack.c.l.b16 %v26
  %v64 = vunpack.c.l.b16 %v27
  %v65 = vunpack.c.l.b16 %v28
  %v66 = vunpack.c.l.b16 %v29
  %v67 = vunpack.c.l.b16 %v30
  %v68 = vpack.c.b16 %v59, %v58
  %v69 = vpack.c.b16 %v61, %v60
  %v70 = vpack.c.b16 %v63, %v62
  %v71 = vpack.c.b16 %v65, %v64
  %v72 = vpack.c.b16 %v67, %v66
  %vm78 = vcmask 654336
  %v80 = vsel %vm78, %v47, 0
  %82 = vmatpush.bf16.msra.mxu0 0
  %83 = vmatpush.bf16.msra.mxu0 0
  %84 = vmatpush.bf16.msra.mxu0 0
  %85 = vmatpush.bf16.msra.mxu0 %v72
  %86 = vmatpush.bf16.msra.mxu0 %v71
  %87 = vmatpush.bf16.msra.mxu0 %v70
  %88 = vmatpush.bf16.msra.mxu0 %v69
  %89 = vmatpush.bf16.msra.mxu0 %v68
  %90 = vmatmul.bf16.gmra.mxu0 %v80
  %v91 = vpop.f32.mrf.mxu0
  %v92 = vadd.f32 %v36, %v91
  %v93 = vpop.f32.mrf.mxu0
  %v94 = vadd.f32 %v41, %v93
  %95 = vdwg.mxu0
  %96 = vst [vmem:[%s4] sm:$0xff] %v92
  %97 = vst [vmem:[%s4 + $0x8] sm:$0xff] %v94
  // Predicated region
  $region18: #{_lambda_.16} parent=0 // pred_check
    _
  $region19: #{_lambda_.16} parent=0 // pred_check_branch
    %99 = sbr.rel (0) target = $region21
  $region20: #{_lambda_.16} parent=0 // pred_region
    _
  $region21: #{_lambda_.16} parent=0 // pred_fallthru
    _
  // Predicated region
  $region22: #{_lambda_.16} parent=0 // pred_check
    _
  $region23: #{_lambda_.16} parent=0 // pred_check_branch
    %101 = sbr.rel (0) target = $region25
  $region24: #{_lambda_.16} parent=0 // pred_region
    _
  $region25: #{_lambda_.16} parent=0 // pred_fallthru
    _

// kernel: _lambda_.18
$region0: #{_lambda_.18}
  #allocation0 [shape = 'u32[]', space=smem, size = 0x4, offset = 0x4, fixed_abs, tag = 'smem constant byte address 0x4 - core index']
  #allocation1 [shape = 'u32[72,128]{1,0:T(1,128)}', space=vmem, size = 0x9000, scoped, tag = 'internal scratch']
  #allocation2 [shape = 'f32[1]{0:T(128)S(6)}', space=smem, size = 0x200, scoped, tag = 'scoped memory for _lambda_.18']
  %s0 = inlined_call_operand.vmem [shape: bf16[144,128], index: 0, kind: input, shape index: {}]
  %s1 = inlined_call_operand.vmem [shape: bf16[16,144], index: 1, kind: input, shape index: {}]
  %s2 = inlined_call_operand.vmem [shape: f32[16,1], index: 2, kind: input, shape index: {}]
  %s3 = inlined_call_operand.<no memory space> [shape: f32[1], index: 3, kind: input, shape index: {}]
  %s4 = inlined_call_operand.vmem [shape: f32[16,128], index: 4, kind: output, shape index: {}]
  %s5 = sld [smem:[#allocation0]]
  $region26: #{_lambda_.18} parent=0
    _
  %s7 = ssub.s32 1, %s5
  %s8 = scalar_select 0, %s7, %s5
  %9 = sst [smem:[#allocation2]] %s3
  // Predicated region
  $region2: #{_lambda_.18} parent=0 // pred_check
    _
  $region3: #{_lambda_.18} parent=0 // pred_check_branch
    %11 = sbr.rel (0) target = $region5
  $region4: #{_lambda_.18} parent=0 // pred_region
    _
  $region5: #{_lambda_.18} parent=0 // pred_fallthru
    _
  // Predicated region
  $region6: #{_lambda_.18} parent=0 // pred_check
    _
  $region7: #{_lambda_.18} parent=0 // pred_check_branch
    %13 = sbr.rel (0) target = $region9
  $region8: #{_lambda_.18} parent=0 // pred_region
    _
  $region9: #{_lambda_.18} parent=0 // pred_fallthru
    _
  // Predicated region
  $region10: #{_lambda_.18} parent=0 // pred_check
    _
  $region11: #{_lambda_.18} parent=0 // pred_check_branch
    %15 = sbr.rel (0) target = $region13
  $region12: #{_lambda_.18} parent=0 // pred_region
    _
  $region13: #{_lambda_.18} parent=0 // pred_fallthru
    _
  // Predicated region
  $region14: #{_lambda_.18} parent=0 // pred_check
    _
  $region15: #{_lambda_.18} parent=0 // pred_check_branch
    %17 = sbr.rel (0) target = $region17
  $region16: #{_lambda_.18} parent=0 // pred_region
    _
  $region17: #{_lambda_.18} parent=0 // pred_fallthru
    _
  %v19 = vld [vmem:[%s1] sm:$0xff]
  %v20 = vld [vmem:[%s1 + $0x8] sm:$0xff]
  %v21 = vld [vmem:[%s0] sm:$0xf]
  %v22 = vld [vmem:[%s0 + $0x4] sm:$0xf]
  %v23 = vld [vmem:[%s0 + $0x8] sm:$0xf]
  %v24 = vld [vmem:[%s0 + $0xc] sm:$0xf]
  %v25 = vld [vmem:[%s0 + $0x10] sm:$0xf]
  %v26 = vld [vmem:[%s0 + $0x14] sm:$0xf]
  %v27 = vld [vmem:[%s0 + $0x18] sm:$0xf]
  %v28 = vld [vmem:[%s0 + $0x1c] sm:$0xf]
  %v29 = vld [vmem:[%s0 + $0x20] sm:$0xf]
  %v30 = vld [vmem:[%s0 + $0x24] sm:$0xf]
  %v31 = vld [vmem:[%s0 + $0x28] sm:$0xf]
  %v32 = vld [vmem:[%s0 + $0x2c] sm:$0xf]
  %v33 = vld [vmem:[%s0 + $0x30] sm:$0xf]
  %v34 = vld [vmem:[%s0 + $0x34] sm:$0xf]
  %v35 = vld [vmem:[%s0 + $0x38] sm:$0xf]
  %v36 = vld [vmem:[%s0 + $0x3c] sm:$0xf]
  %v37 = vld [vmem:[%s0 + $0x40] sm:$0xf]
  %v38 = vld [vmem:[%s0 + $0x44] sm:$0xf]
  %v39 = vld [vmem:[%s2] sm:$0xff]
  %v40 = vld [vmem:[%s2 + $0x8] sm:$0xff]
  %42 = vset.pattern.permute.xlu0 0
  %43 = vperm.xlu0 %42, %v39
  %v44 = vpop.permute.xlu0 %43
  %47 = vset.pattern.permute.xlu0 0
  %48 = vperm.xlu0 %47, %v40
  %v49 = vpop.permute.xlu0 %48
  %v53 = vunpack.c.l.b16 %v19
  %v54 = vunpack.c.h.b16 %v19
  %v55 = vunpack.c.l.b16 %v20
  %v56 = vunpack.c.h.b16 %v20
  %v57 = vpack.c.b16 %v55, %v53
  %v58 = vpack.c.b16 %v56, %v54
  %v78 = vunpack.c.l.b16 %v21
  %v79 = vunpack.c.l.b16 %v22
  %v80 = vunpack.c.l.b16 %v23
  %v81 = vunpack.c.l.b16 %v24
  %v82 = vunpack.c.l.b16 %v25
  %v83 = vunpack.c.l.b16 %v26
  %v84 = vunpack.c.l.b16 %v27
  %v85 = vunpack.c.l.b16 %v28
  %v86 = vunpack.c.l.b16 %v29
  %v87 = vunpack.c.l.b16 %v30
  %v88 = vunpack.c.l.b16 %v31
  %v89 = vunpack.c.l.b16 %v32
  %v90 = vunpack.c.l.b16 %v33
  %v91 = vunpack.c.l.b16 %v34
  %v92 = vunpack.c.l.b16 %v35
  %v93 = vunpack.c.l.b16 %v36
  %v94 = vunpack.c.l.b16 %v37
  %v95 = vunpack.c.l.b16 %v38
  %v96 = vpack.c.b16 %v79, %v78
  %v97 = vpack.c.b16 %v81, %v80
  %v98 = vpack.c.b16 %v83, %v82
  %v99 = vpack.c.b16 %v85, %v84
  %v100 = vpack.c.b16 %v87, %v86
  %v101 = vpack.c.b16 %v89, %v88
  %v102 = vpack.c.b16 %v91, %v90
  %v103 = vpack.c.b16 %v93, %v92
  %v104 = vpack.c.b16 %v95, %v94
  %vm114 = vcmask 130048
  %v116 = vsel %vm114, %v58, 0
  %118 = vmatpush.bf16.msra.mxu0 %v103
  %119 = vmatpush.bf16.msra.mxu0 %v102
  %120 = vmatpush.bf16.msra.mxu0 %v101
  %121 = vmatpush.bf16.msra.mxu0 %v100
  %122 = vmatpush.bf16.msra.mxu0 %v99
  %123 = vmatpush.bf16.msra.mxu0 %v98
  %124 = vmatpush.bf16.msra.mxu0 %v97
  %125 = vmatpush.bf16.msra.mxu0 %v96
  %126 = vmatmul.bf16.gmra.mxu0 %v57
  %v127 = vpop.f32.mrf.mxu0
  %v128 = vadd.f32 %v44, %v127
  %v129 = vpop.f32.mrf.mxu0
  %v130 = vadd.f32 %v49, %v129
  %131 = vdwg.mxu0
  %132 = vmatpush.bf16.msra.mxu0 0
  %133 = vmatpush.bf16.msra.mxu0 0
  %134 = vmatpush.bf16.msra.mxu0 0
  %135 = vmatpush.bf16.msra.mxu0 0
  %136 = vmatpush.bf16.msra.mxu0 0
  %137 = vmatpush.bf16.msra.mxu0 0
  %138 = vmatpush.bf16.msra.mxu0 0
  %139 = vmatpush.bf16.msra.mxu0 %v104
  %140 = vmatmul.bf16.gmra.mxu0 %v116
  %v141 = vpop.f32.mrf.mxu0
  %v142 = vadd.f32 %v128, %v141
  %v143 = vpop.f32.mrf.mxu0
  %v144 = vadd.f32 %v130, %v143
  %145 = vdwg.mxu0
  %s146 = sld [smem:[#allocation2]]
  %vm147 = vcmp.ge.f32.partialorder %v142, 0.0
  %vm148 = vcmp.ge.f32.partialorder %v144, 0.0
  %v149 = vstv %s146
  %v150 = vmul.f32 %v149, %v142
  %v151 = vmul.f32 %v149, %v144
  %v152 = vsel %vm147, %v142, %v150
  %v153 = vsel %vm148, %v144, %v151
  %154 = vst [vmem:[%s4] sm:$0xff] %v152
  %155 = vst [vmem:[%s4 + $0x8] sm:$0xff] %v153
  // Predicated region
  $region18: #{_lambda_.18} parent=0 // pred_check
    _
  $region19: #{_lambda_.18} parent=0 // pred_check_branch
    %157 = sbr.rel (0) target = $region21
  $region20: #{_lambda_.18} parent=0 // pred_region
    _
  $region21: #{_lambda_.18} parent=0 // pred_fallthru
    _
  // Predicated region
  $region22: #{_lambda_.18} parent=0 // pred_check
    _
  $region23: #{_lambda_.18} parent=0 // pred_check_branch
    %159 = sbr.rel (0) target = $region25
  $region24: #{_lambda_.18} parent=0 // pred_region
    _
  $region25: #{_lambda_.18} parent=0 // pred_fallthru
    _

// kernel: _lambda_.19
$region0: #{_lambda_.19}
  #allocation0 [shape = 'u32[]', space=smem, size = 0x4, offset = 0x4, fixed_abs, tag = 'smem constant byte address 0x4 - core index']
  #allocation1 [shape = 'u32[72,128]{1,0:T(1,128)}', space=vmem, size = 0x9000, scoped, tag = 'internal scratch']
  #allocation2 [shape = 'f32[1]{0:T(128)S(6)}', space=smem, size = 0x200, scoped, tag = 'scoped memory for _lambda_.19']
  %s0 = inlined_call_operand.vmem [shape: bf16[144,128], index: 0, kind: input, shape index: {}]
  %s1 = inlined_call_operand.vmem [shape: bf16[16,144], index: 1, kind: input, shape index: {}]
  %s2 = inlined_call_operand.vmem [shape: f32[16,1], index: 2, kind: input, shape index: {}]
  %s3 = inlined_call_operand.<no memory space> [shape: f32[1], index: 3, kind: input, shape index: {}]
  %s4 = inlined_call_operand.vmem [shape: f32[16,128], index: 4, kind: input, shape index: {}]
  %s5 = inlined_call_operand.vmem [shape: f32[16,128], index: 5, kind: output, shape index: {0}]
  %s6 = inlined_call_operand.vmem [shape: f32[16,128], index: 6, kind: output, shape index: {1}]
  %7 = xla_tuple %s5, %s6
  %s8 = sld [smem:[#allocation0]]
  $region38: #{_lambda_.19} parent=0
    _
  %s10 = ssub.s32 1, %s8
  %s11 = scalar_select 0, %s10, %s8
  %12 = sst [smem:[#allocation2]] %s3
  // Predicated region
  $region2: #{_lambda_.19} parent=0 // pred_check
    _
  $region3: #{_lambda_.19} parent=0 // pred_check_branch
    %14 = sbr.rel (0) target = $region5
  $region4: #{_lambda_.19} parent=0 // pred_region
    _
  $region5: #{_lambda_.19} parent=0 // pred_fallthru
    _
  // Predicated region
  $region6: #{_lambda_.19} parent=0 // pred_check
    _
  $region7: #{_lambda_.19} parent=0 // pred_check_branch
    %16 = sbr.rel (0) target = $region9
  $region8: #{_lambda_.19} parent=0 // pred_region
    _
  $region9: #{_lambda_.19} parent=0 // pred_fallthru
    _
  // Predicated region
  $region10: #{_lambda_.19} parent=0 // pred_check
    _
  $region11: #{_lambda_.19} parent=0 // pred_check_branch
    %18 = sbr.rel (0) target = $region13
  $region12: #{_lambda_.19} parent=0 // pred_region
    _
  $region13: #{_lambda_.19} parent=0 // pred_fallthru
    _
  // Predicated region
  $region14: #{_lambda_.19} parent=0 // pred_check
    _
  $region15: #{_lambda_.19} parent=0 // pred_check_branch
    %20 = sbr.rel (0) target = $region17
  $region16: #{_lambda_.19} parent=0 // pred_region
    _
  $region17: #{_lambda_.19} parent=0 // pred_fallthru
    _
  // Predicated region
  $region18: #{_lambda_.19} parent=0 // pred_check
    _
  $region19: #{_lambda_.19} parent=0 // pred_check_branch
    %22 = sbr.rel (0) target = $region21
  $region20: #{_lambda_.19} parent=0 // pred_region
    _
  $region21: #{_lambda_.19} parent=0 // pred_fallthru
    _
  %v24 = vld [vmem:[%s1] sm:$0xff]
  %v25 = vld [vmem:[%s1 + $0x8] sm:$0xff]
  %v26 = vld [vmem:[%s0] sm:$0xf]
  %v27 = vld [vmem:[%s0 + $0x4] sm:$0xf]
  %v28 = vld [vmem:[%s0 + $0x8] sm:$0xf]
  %v29 = vld [vmem:[%s0 + $0xc] sm:$0xf]
  %v30 = vld [vmem:[%s0 + $0x10] sm:$0xf]
  %v31 = vld [vmem:[%s0 + $0x14] sm:$0xf]
  %v32 = vld [vmem:[%s0 + $0x18] sm:$0xf]
  %v33 = vld [vmem:[%s0 + $0x1c] sm:$0xf]
  %v34 = vld [vmem:[%s0 + $0x20] sm:$0xf]
  %v35 = vld [vmem:[%s0 + $0x24] sm:$0xf]
  %v36 = vld [vmem:[%s0 + $0x28] sm:$0xf]
  %v37 = vld [vmem:[%s0 + $0x2c] sm:$0xf]
  %v38 = vld [vmem:[%s0 + $0x30] sm:$0xf]
  %v39 = vld [vmem:[%s0 + $0x34] sm:$0xf]
  %v40 = vld [vmem:[%s0 + $0x38] sm:$0xf]
  %v41 = vld [vmem:[%s0 + $0x3c] sm:$0xf]
  %v42 = vld [vmem:[%s0 + $0x40] sm:$0xf]
  %v43 = vld [vmem:[%s0 + $0x44] sm:$0xf]
  %v44 = vld [vmem:[%s2] sm:$0xff]
  %v45 = vld [vmem:[%s2 + $0x8] sm:$0xff]
  %47 = vset.pattern.permute.xlu0 0
  %48 = vperm.xlu0 %47, %v44
  %v49 = vpop.permute.xlu0 %48
  %52 = vset.pattern.permute.xlu0 0
  %53 = vperm.xlu0 %52, %v45
  %v54 = vpop.permute.xlu0 %53
  %v58 = vunpack.c.l.b16 %v24
  %v59 = vunpack.c.h.b16 %v24
  %v60 = vunpack.c.l.b16 %v25
  %v61 = vunpack.c.h.b16 %v25
  %v62 = vpack.c.b16 %v60, %v58
  %v63 = vpack.c.b16 %v61, %v59
  %v83 = vunpack.c.l.b16 %v26
  %v84 = vunpack.c.l.b16 %v27
  %v85 = vunpack.c.l.b16 %v28
  %v86 = vunpack.c.l.b16 %v29
  %v87 = vunpack.c.l.b16 %v30
  %v88 = vunpack.c.l.b16 %v31
  %v89 = vunpack.c.l.b16 %v32
  %v90 = vunpack.c.l.b16 %v33
  %v91 = vunpack.c.l.b16 %v34
  %v92 = vunpack.c.l.b16 %v35
  %v93 = vunpack.c.l.b16 %v36
  %v94 = vunpack.c.l.b16 %v37
  %v95 = vunpack.c.l.b16 %v38
  %v96 = vunpack.c.l.b16 %v39
  %v97 = vunpack.c.l.b16 %v40
  %v98 = vunpack.c.l.b16 %v41
  %v99 = vunpack.c.l.b16 %v42
  %v100 = vunpack.c.l.b16 %v43
  %v101 = vpack.c.b16 %v84, %v83
  %v102 = vpack.c.b16 %v86, %v85
  %v103 = vpack.c.b16 %v88, %v87
  %v104 = vpack.c.b16 %v90, %v89
  %v105 = vpack.c.b16 %v92, %v91
  %v106 = vpack.c.b16 %v94, %v93
  %v107 = vpack.c.b16 %v96, %v95
  %v108 = vpack.c.b16 %v98, %v97
  %v109 = vpack.c.b16 %v100, %v99
  %vm119 = vcmask 130048
  %v121 = vsel %vm119, %v63, 0
  %123 = vmatpush.bf16.msra.mxu0 %v108
  %124 = vmatpush.bf16.msra.mxu0 %v107
  %125 = vmatpush.bf16.msra.mxu0 %v106
  %126 = vmatpush.bf16.msra.mxu0 %v105
  %127 = vmatpush.bf16.msra.mxu0 %v104
  %128 = vmatpush.bf16.msra.mxu0 %v103
  %129 = vmatpush.bf16.msra.mxu0 %v102
  %130 = vmatpush.bf16.msra.mxu0 %v101
  %131 = vmatmul.bf16.gmra.mxu0 %v62
  %v132 = vpop.f32.mrf.mxu0
  %v133 = vadd.f32 %v49, %v132
  %v134 = vpop.f32.mrf.mxu0
  %v135 = vadd.f32 %v54, %v134
  %136 = vdwg.mxu0
  %137 = vmatpush.bf16.msra.mxu0 0
  %138 = vmatpush.bf16.msra.mxu0 0
  %139 = vmatpush.bf16.msra.mxu0 0
  %140 = vmatpush.bf16.msra.mxu0 0
  %141 = vmatpush.bf16.msra.mxu0 0
  %142 = vmatpush.bf16.msra.mxu0 0
  %143 = vmatpush.bf16.msra.mxu0 0
  %144 = vmatpush.bf16.msra.mxu0 %v109
  %145 = vmatmul.bf16.gmra.mxu0 %v121
  %v146 = vpop.f32.mrf.mxu0
  %v147 = vadd.f32 %v133, %v146
  %v148 = vpop.f32.mrf.mxu0
  %v149 = vadd.f32 %v135, %v148
  %150 = vdwg.mxu0
  %s151 = sld [smem:[#allocation2]]
  %vm152 = vcmp.ge.f32.partialorder %v147, 0.0
  %vm153 = vcmp.ge.f32.partialorder %v149, 0.0
  %v154 = vstv %s151
  %v155 = vmul.f32 %v154, %v147
  %v156 = vmul.f32 %v154, %v149
  %v157 = vsel %vm152, %v147, %v155
  %v158 = vsel %vm153, %v149, %v156
  %159 = vst [vmem:[%s5] sm:$0xff] %v157
  %160 = vst [vmem:[%s5 + $0x8] sm:$0xff] %v158
  %v161 = vld [vmem:[%s4] sm:$0xff]
  %v162 = vld [vmem:[%s4 + $0x8] sm:$0xff]
  %v163 = vadd.f32 %v157, %v161
  %v164 = vadd.f32 %v158, %v162
  %165 = vst [vmem:[%s6] sm:$0xff] %v163
  %166 = vst [vmem:[%s6 + $0x8] sm:$0xff] %v164
  // Predicated region
  $region22: #{_lambda_.19} parent=0 // pred_check
    _
  $region23: #{_lambda_.19} parent=0 // pred_check_branch
    %168 = sbr.rel (0) target = $region25
  $region24: #{_lambda_.19} parent=0 // pred_region
    _
  $region25: #{_lambda_.19} parent=0 // pred_fallthru
    _
  // Predicated region
  $region26: #{_lambda_.19} parent=0 // pred_check
    _
  $region27: #{_lambda_.19} parent=0 // pred_check_branch
    %170 = sbr.rel (0) target = $region29
  $region28: #{_lambda_.19} parent=0 // pred_region
    _
  $region29: #{_lambda_.19} parent=0 // pred_fallthru
    _
  // Predicated region
  $region30: #{_lambda_.19} parent=0 // pred_check
    _
  $region31: #{_lambda_.19} parent=0 // pred_check_branch
    %172 = sbr.rel (0) target = $region33
  $region32: #{_lambda_.19} parent=0 // pred_region
    _
  $region33: #{_lambda_.19} parent=0 // pred_fallthru
    _
  // Predicated region
  $region34: #{_lambda_.19} parent=0 // pred_check
    _
  $region35: #{_lambda_.19} parent=0 // pred_check_branch
    %174 = sbr.rel (0) target = $region37
  $region36: #{_lambda_.19} parent=0 // pred_region
    _
  $region37: #{_lambda_.19} parent=0 // pred_fallthru
    _

// kernel: _lambda_.20
$region0: #{_lambda_.20}
  #allocation0 [shape = 'u32[]', space=smem, size = 0x4, offset = 0x4, fixed_abs, tag = 'smem constant byte address 0x4 - core index']
  #allocation1 [shape = 'u32[72,128]{1,0:T(1,128)}', space=vmem, size = 0x9000, scoped, tag = 'internal scratch']
  #allocation2 [shape = 'f32[1]{0:T(128)S(6)}', space=smem, size = 0x200, scoped, tag = 'scoped memory for _lambda_.20']
  %s0 = inlined_call_operand.vmem [shape: bf16[144,128], index: 0, kind: input, shape index: {}]
  %s1 = inlined_call_operand.vmem [shape: bf16[32,144], index: 1, kind: input, shape index: {}]
  %s2 = inlined_call_operand.vmem [shape: f32[32,1], index: 2, kind: input, shape index: {}]
  %s3 = inlined_call_operand.<no memory space> [shape: f32[1], index: 3, kind: input, shape index: {}]
  %s4 = inlined_call_operand.vmem [shape: f32[32,128], index: 4, kind: output, shape index: {}]
  %s5 = sld [smem:[#allocation0]]
  $region26: #{_lambda_.20} parent=0
    _
  %s7 = ssub.s32 1, %s5
  %s8 = scalar_select 0, %s7, %s5
  %9 = sst [smem:[#allocation2]] %s3
  // Predicated region
  $region2: #{_lambda_.20} parent=0 // pred_check
    _
  $region3: #{_lambda_.20} parent=0 // pred_check_branch
    %11 = sbr.rel (0) target = $region5
  $region4: #{_lambda_.20} parent=0 // pred_region
    _
  $region5: #{_lambda_.20} parent=0 // pred_fallthru
    _
  // Predicated region
  $region6: #{_lambda_.20} parent=0 // pred_check
    _
  $region7: #{_lambda_.20} parent=0 // pred_check_branch
    %13 = sbr.rel (0) target = $region9
  $region8: #{_lambda_.20} parent=0 // pred_region
    _
  $region9: #{_lambda_.20} parent=0 // pred_fallthru
    _
  // Predicated region
  $region10: #{_lambda_.20} parent=0 // pred_check
    _
  $region11: #{_lambda_.20} parent=0 // pred_check_branch
    %15 = sbr.rel (0) target = $region13
  $region12: #{_lambda_.20} parent=0 // pred_region
    _
  $region13: #{_lambda_.20} parent=0 // pred_fallthru
    _
  // Predicated region
  $region14: #{_lambda_.20} parent=0 // pred_check
    _
  $region15: #{_lambda_.20} parent=0 // pred_check_branch
    %17 = sbr.rel (0) target = $region17
  $region16: #{_lambda_.20} parent=0 // pred_region
    _
  $region17: #{_lambda_.20} parent=0 // pred_fallthru
    _
  %v19 = vld [vmem:[%s1] sm:$0xff]
  %v20 = vld [vmem:[%s1 + $0x8] sm:$0xff]
  %v21 = vld [vmem:[%s1 + $0x10] sm:$0xff]
  %v22 = vld [vmem:[%s1 + $0x18] sm:$0xff]
  %v23 = vld [vmem:[%s0] sm:$0xf]
  %v24 = vld [vmem:[%s0 + $0x4] sm:$0xf]
  %v25 = vld [vmem:[%s0 + $0x8] sm:$0xf]
  %v26 = vld [vmem:[%s0 + $0xc] sm:$0xf]
  %v27 = vld [vmem:[%s0 + $0x10] sm:$0xf]
  %v28 = vld [vmem:[%s0 + $0x14] sm:$0xf]
  %v29 = vld [vmem:[%s0 + $0x18] sm:$0xf]
  %v30 = vld [vmem:[%s0 + $0x1c] sm:$0xf]
  %v31 = vld [vmem:[%s0 + $0x20] sm:$0xf]
  %v32 = vld [vmem:[%s0 + $0x24] sm:$0xf]
  %v33 = vld [vmem:[%s0 + $0x28] sm:$0xf]
  %v34 = vld [vmem:[%s0 + $0x2c] sm:$0xf]
  %v35 = vld [vmem:[%s0 + $0x30] sm:$0xf]
  %v36 = vld [vmem:[%s0 + $0x34] sm:$0xf]
  %v37 = vld [vmem:[%s0 + $0x38] sm:$0xf]
  %v38 = vld [vmem:[%s0 + $0x3c] sm:$0xf]
  %v39 = vld [vmem:[%s0 + $0x40] sm:$0xf]
  %v40 = vld [vmem:[%s0 + $0x44] sm:$0xf]
  %v41 = vld [vmem:[%s2] sm:$0xff]
  %v42 = vld [vmem:[%s2 + $0x8] sm:$0xff]
  %v43 = vld [vmem:[%s2 + $0x10] sm:$0xff]
  %v44 = vld [vmem:[%s2 + $0x18] sm:$0xff]
  %46 = vset.pattern.permute.xlu0 0
  %47 = vperm.xlu0 %46, %v41
  %v48 = vpop.permute.xlu0 %47
  %51 = vset.pattern.permute.xlu0 0
  %52 = vperm.xlu0 %51, %v42
  %v53 = vpop.permute.xlu0 %52
  %56 = vset.pattern.permute.xlu0 0
  %57 = vperm.xlu0 %56, %v43
  %v58 = vpop.permute.xlu0 %57
  %61 = vset.pattern.permute.xlu0 0
  %62 = vperm.xlu0 %61, %v44
  %v63 = vpop.permute.xlu0 %62
  %v69 = vunpack.c.l.b16 %v19
  %v70 = vunpack.c.h.b16 %v19
  %v71 = vunpack.c.l.b16 %v20
  %v72 = vunpack.c.h.b16 %v20
  %v73 = vunpack.c.l.b16 %v21
  %v74 = vunpack.c.h.b16 %v21
  %v75 = vunpack.c.l.b16 %v22
  %v76 = vunpack.c.h.b16 %v22
  %v77 = vpack.c.b16 %v71, %v69
  %v78 = vpack.c.b16 %v72, %v70
  %v79 = vpack.c.b16 %v75, %v73
  %v80 = vpack.c.b16 %v76, %v74
  %v101 = vunpack.c.l.b16 %v23
  %v102 = vunpack.c.l.b16 %v24
  %v103 = vunpack.c.l.b16 %v25
  %v104 = vunpack.c.l.b16 %v26
  %v105 = vunpack.c.l.b16 %v27
  %v106 = vunpack.c.l.b16 %v28
  %v107 = vunpack.c.l.b16 %v29
  %v108 = vunpack.c.l.b16 %v30
  %v109 = vunpack.c.l.b16 %v31
  %v110 = vunpack.c.l.b16 %v32
  %v111 = vunpack.c.l.b16 %v33
  %v112 = vunpack.c.l.b16 %v34
  %v113 = vunpack.c.l.b16 %v35
  %v114 = vunpack.c.l.b16 %v36
  %v115 = vunpack.c.l.b16 %v37
  %v116 = vunpack.c.l.b16 %v38
  %v117 = vunpack.c.l.b16 %v39
  %v118 = vunpack.c.l.b16 %v40
  %v119 = vpack.c.b16 %v102, %v101
  %v120 = vpack.c.b16 %v104, %v103
  %v121 = vpack.c.b16 %v106, %v105
  %v122 = vpack.c.b16 %v108, %v107
  %v123 = vpack.c.b16 %v110, %v109
  %v124 = vpack.c.b16 %v112, %v111
  %v125 = vpack.c.b16 %v114, %v113
  %v126 = vpack.c.b16 %v116, %v115
  %v127 = vpack.c.b16 %v118, %v117
  %vm137 = vcmask 130048
  %v139 = vsel %vm137, %v78, 0
  %v142 = vsel %vm137, %v80, 0
  %144 = vmatpush.bf16.msra.mxu0 %v126
  %145 = vmatpush.bf16.msra.mxu0 %v125
  %146 = vmatpush.bf16.msra.mxu0 %v124
  %147 = vmatpush.bf16.msra.mxu0 %v123
  %148 = vmatpush.bf16.msra.mxu0 %v122
  %149 = vmatpush.bf16.msra.mxu0 %v121
  %150 = vmatpush.bf16.msra.mxu0 %v120
  %151 = vmatpush.bf16.msra.mxu0 %v119
  %152 = vmatmul.bf16.gmra.mxu0 %v77
  %v153 = vpop.f32.mrf.mxu0
  %v154 = vadd.f32 %v48, %v153
  %v155 = vpop.f32.mrf.mxu0
  %v156 = vadd.f32 %v53, %v155
  %157 = vmatmul.bf16.gmra.mxu0 %v79
  %v158 = vpop.f32.mrf.mxu0
  %v159 = vadd.f32 %v58, %v158
  %v160 = vpop.f32.mrf.mxu0
  %v161 = vadd.f32 %v63, %v160
  %162 = vdwg.mxu0
  %163 = vmatpush.bf16.msra.mxu0 0
  %164 = vmatpush.bf16.msra.mxu0 0
  %165 = vmatpush.bf16.msra.mxu0 0
  %166 = vmatpush.bf16.msra.mxu0 0
  %167 = vmatpush.bf16.msra.mxu0 0
  %168 = vmatpush.bf16.msra.mxu0 0
  %169 = vmatpush.bf16.msra.mxu0 0
  %170 = vmatpush.bf16.msra.mxu0 %v127
  %171 = vmatmul.bf16.gmra.mxu0 %v139
  %v172 = vpop.f32.mrf.mxu0
  %v173 = vadd.f32 %v154, %v172
  %v174 = vpop.f32.mrf.mxu0
  %v175 = vadd.f32 %v156, %v174
  %176 = vmatmul.bf16.gmra.mxu0 %v142
  %v177 = vpop.f32.mrf.mxu0
  %v178 = vadd.f32 %v159, %v177
  %v179 = vpop.f32.mrf.mxu0
  %v180 = vadd.f32 %v161, %v179
  %181 = vdwg.mxu0
  %182 = vst [vmem:[%s4] sm:$0xff] %v173
  %183 = vst [vmem:[%s4 + $0x8] sm:$0xff] %v175
  %184 = vst [vmem:[%s4 + $0x10] sm:$0xff] %v178
  %185 = vst [vmem:[%s4 + $0x18] sm:$0xff] %v180
  // Predicated region
  $region18: #{_lambda_.20} parent=0 // pred_check
    _
  $region19: #{_lambda_.20} parent=0 // pred_check_branch
    %187 = sbr.rel (0) target = $region21
  $region20: #{_lambda_.20} parent=0 // pred_region
    _
  $region21: #{_lambda_.20} parent=0 // pred_fallthru
    _
  // Predicated region
  $region22: #{_lambda_.20} parent=0 // pred_check
    _
  $region23: #{_lambda_.20} parent=0 // pred_check_branch
    %189 = sbr.rel (0) target = $region25
  $region24: #{_lambda_.20} parent=0 // pred_region
    _
  $region25: #{_lambda_.20} parent=0 // pred_fallthru
    _

// kernel: _lambda_.21
$region0: #{_lambda_.21}
  #allocation0 [shape = 'u32[]', space=smem, size = 0x4, offset = 0x4, fixed_abs, tag = 'smem constant byte address 0x4 - core index']
  #allocation1 [shape = 'u32[72,128]{1,0:T(1,128)}', space=vmem, size = 0x9000, scoped, tag = 'internal scratch']
  #allocation2 [shape = 'f32[1]{0:T(128)S(6)}', space=smem, size = 0x200, scoped, tag = 'scoped memory for _lambda_.21']
  %s0 = inlined_call_operand.vmem [shape: bf16[144,128], index: 0, kind: input, shape index: {}]
  %s1 = inlined_call_operand.vmem [shape: bf16[32,144], index: 1, kind: input, shape index: {}]
  %s2 = inlined_call_operand.vmem [shape: f32[32,1], index: 2, kind: input, shape index: {}]
  %s3 = inlined_call_operand.<no memory space> [shape: f32[1], index: 3, kind: input, shape index: {}]
  %s4 = inlined_call_operand.vmem [shape: f32[32,128], index: 4, kind: output, shape index: {}]
  %s5 = sld [smem:[#allocation0]]
  $region26: #{_lambda_.21} parent=0
    _
  %s7 = ssub.s32 1, %s5
  %s8 = scalar_select 0, %s7, %s5
  %9 = sst [smem:[#allocation2]] %s3
  // Predicated region
  $region2: #{_lambda_.21} parent=0 // pred_check
    _
  $region3: #{_lambda_.21} parent=0 // pred_check_branch
    %11 = sbr.rel (0) target = $region5
  $region4: #{_lambda_.21} parent=0 // pred_region
    _
  $region5: #{_lambda_.21} parent=0 // pred_fallthru
    _
  // Predicated region
  $region6: #{_lambda_.21} parent=0 // pred_check
    _
  $region7: #{_lambda_.21} parent=0 // pred_check_branch
    %13 = sbr.rel (0) target = $region9
  $region8: #{_lambda_.21} parent=0 // pred_region
    _
  $region9: #{_lambda_.21} parent=0 // pred_fallthru
    _
  // Predicated region
  $region10: #{_lambda_.21} parent=0 // pred_check
    _
  $region11: #{_lambda_.21} parent=0 // pred_check_branch
    %15 = sbr.rel (0) target = $region13
  $region12: #{_lambda_.21} parent=0 // pred_region
    _
  $region13: #{_lambda_.21} parent=0 // pred_fallthru
    _
  // Predicated region
  $region14: #{_lambda_.21} parent=0 // pred_check
    _
  $region15: #{_lambda_.21} parent=0 // pred_check_branch
    %17 = sbr.rel (0) target = $region17
  $region16: #{_lambda_.21} parent=0 // pred_region
    _
  $region17: #{_lambda_.21} parent=0 // pred_fallthru
    _
  %v19 = vld [vmem:[%s1] sm:$0xff]
  %v20 = vld [vmem:[%s1 + $0x8] sm:$0xff]
  %v21 = vld [vmem:[%s1 + $0x10] sm:$0xff]
  %v22 = vld [vmem:[%s1 + $0x18] sm:$0xff]
  %v23 = vld [vmem:[%s0] sm:$0xf]
  %v24 = vld [vmem:[%s0 + $0x4] sm:$0xf]
  %v25 = vld [vmem:[%s0 + $0x8] sm:$0xf]
  %v26 = vld [vmem:[%s0 + $0xc] sm:$0xf]
  %v27 = vld [vmem:[%s0 + $0x10] sm:$0xf]
  %v28 = vld [vmem:[%s0 + $0x14] sm:$0xf]
  %v29 = vld [vmem:[%s0 + $0x18] sm:$0xf]
  %v30 = vld [vmem:[%s0 + $0x1c] sm:$0xf]
  %v31 = vld [vmem:[%s0 + $0x20] sm:$0xf]
  %v32 = vld [vmem:[%s0 + $0x24] sm:$0xf]
  %v33 = vld [vmem:[%s0 + $0x28] sm:$0xf]
  %v34 = vld [vmem:[%s0 + $0x2c] sm:$0xf]
  %v35 = vld [vmem:[%s0 + $0x30] sm:$0xf]
  %v36 = vld [vmem:[%s0 + $0x34] sm:$0xf]
  %v37 = vld [vmem:[%s0 + $0x38] sm:$0xf]
  %v38 = vld [vmem:[%s0 + $0x3c] sm:$0xf]
  %v39 = vld [vmem:[%s0 + $0x40] sm:$0xf]
  %v40 = vld [vmem:[%s0 + $0x44] sm:$0xf]
  %v41 = vld [vmem:[%s2] sm:$0xff]
  %v42 = vld [vmem:[%s2 + $0x8] sm:$0xff]
  %v43 = vld [vmem:[%s2 + $0x10] sm:$0xff]
  %v44 = vld [vmem:[%s2 + $0x18] sm:$0xff]
  %46 = vset.pattern.permute.xlu0 0
  %47 = vperm.xlu0 %46, %v41
  %v48 = vpop.permute.xlu0 %47
  %51 = vset.pattern.permute.xlu0 0
  %52 = vperm.xlu0 %51, %v42
  %v53 = vpop.permute.xlu0 %52
  %56 = vset.pattern.permute.xlu0 0
  %57 = vperm.xlu0 %56, %v43
  %v58 = vpop.permute.xlu0 %57
  %61 = vset.pattern.permute.xlu0 0
  %62 = vperm.xlu0 %61, %v44
  %v63 = vpop.permute.xlu0 %62
  %v69 = vunpack.c.l.b16 %v19
  %v70 = vunpack.c.h.b16 %v19
  %v71 = vunpack.c.l.b16 %v20
  %v72 = vunpack.c.h.b16 %v20
  %v73 = vunpack.c.l.b16 %v21
  %v74 = vunpack.c.h.b16 %v21
  %v75 = vunpack.c.l.b16 %v22
  %v76 = vunpack.c.h.b16 %v22
  %v77 = vpack.c.b16 %v71, %v69
  %v78 = vpack.c.b16 %v72, %v70
  %v79 = vpack.c.b16 %v75, %v73
  %v80 = vpack.c.b16 %v76, %v74
  %v101 = vunpack.c.l.b16 %v23
  %v102 = vunpack.c.l.b16 %v24
  %v103 = vunpack.c.l.b16 %v25
  %v104 = vunpack.c.l.b16 %v26
  %v105 = vunpack.c.l.b16 %v27
  %v106 = vunpack.c.l.b16 %v28
  %v107 = vunpack.c.l.b16 %v29
  %v108 = vunpack.c.l.b16 %v30
  %v109 = vunpack.c.l.b16 %v31
  %v110 = vunpack.c.l.b16 %v32
  %v111 = vunpack.c.l.b16 %v33
  %v112 = vunpack.c.l.b16 %v34
  %v113 = vunpack.c.l.b16 %v35
  %v114 = vunpack.c.l.b16 %v36
  %v115 = vunpack.c.l.b16 %v37
  %v116 = vunpack.c.l.b16 %v38
  %v117 = vunpack.c.l.b16 %v39
  %v118 = vunpack.c.l.b16 %v40
  %v119 = vpack.c.b16 %v102, %v101
  %v120 = vpack.c.b16 %v104, %v103
  %v121 = vpack.c.b16 %v106, %v105
  %v122 = vpack.c.b16 %v108, %v107
  %v123 = vpack.c.b16 %v110, %v109
  %v124 = vpack.c.b16 %v112, %v111
  %v125 = vpack.c.b16 %v114, %v113
  %v126 = vpack.c.b16 %v116, %v115
  %v127 = vpack.c.b16 %v118, %v117
  %vm137 = vcmask 130048
  %v139 = vsel %vm137, %v78, 0
  %v142 = vsel %vm137, %v80, 0
  %144 = vmatpush.bf16.msra.mxu0 %v126
  %145 = vmatpush.bf16.msra.mxu0 %v125
  %146 = vmatpush.bf16.msra.mxu0 %v124
  %147 = vmatpush.bf16.msra.mxu0 %v123
  %148 = vmatpush.bf16.msra.mxu0 %v122
  %149 = vmatpush.bf16.msra.mxu0 %v121
  %150 = vmatpush.bf16.msra.mxu0 %v120
  %151 = vmatpush.bf16.msra.mxu0 %v119
  %152 = vmatmul.bf16.gmra.mxu0 %v77
  %v153 = vpop.f32.mrf.mxu0
  %v154 = vadd.f32 %v48, %v153
  %v155 = vpop.f32.mrf.mxu0
  %v156 = vadd.f32 %v53, %v155
  %157 = vmatmul.bf16.gmra.mxu0 %v79
  %v158 = vpop.f32.mrf.mxu0
  %v159 = vadd.f32 %v58, %v158
  %v160 = vpop.f32.mrf.mxu0
  %v161 = vadd.f32 %v63, %v160
  %162 = vdwg.mxu0
  %163 = vmatpush.bf16.msra.mxu0 0
  %164 = vmatpush.bf16.msra.mxu0 0
  %165 = vmatpush.bf16.msra.mxu0 0
  %166 = vmatpush.bf16.msra.mxu0 0
  %167 = vmatpush.bf16.msra.mxu0 0
  %168 = vmatpush.bf16.msra.mxu0 0
  %169 = vmatpush.bf16.msra.mxu0 0
  %170 = vmatpush.bf16.msra.mxu0 %v127
  %171 = vmatmul.bf16.gmra.mxu0 %v139
  %v172 = vpop.f32.mrf.mxu0
  %v173 = vadd.f32 %v154, %v172
  %v174 = vpop.f32.mrf.mxu0
  %v175 = vadd.f32 %v156, %v174
  %176 = vmatmul.bf16.gmra.mxu0 %v142
  %v177 = vpop.f32.mrf.mxu0
  %v178 = vadd.f32 %v159, %v177
  %v179 = vpop.f32.mrf.mxu0
  %v180 = vadd.f32 %v161, %v179
  %181 = vdwg.mxu0
  %s182 = sld [smem:[#allocation2]]
  %vm183 = vcmp.ge.f32.partialorder %v173, 0.0
  %vm184 = vcmp.ge.f32.partialorder %v175, 0.0
  %vm185 = vcmp.ge.f32.partialorder %v178, 0.0
  %vm186 = vcmp.ge.f32.partialorder %v180, 0.0
  %v187 = vstv %s182
  %v188 = vmul.f32 %v187, %v173
  %v189 = vmul.f32 %v187, %v175
  %v190 = vmul.f32 %v187, %v178
  %v191 = vmul.f32 %v187, %v180
  %v192 = vsel %vm183, %v173, %v188
  %v193 = vsel %vm184, %v175, %v189
  %v194 = vsel %vm185, %v178, %v190
  %v195 = vsel %vm186, %v180, %v191
  %196 = vst [vmem:[%s4] sm:$0xff] %v192
  %197 = vst [vmem:[%s4 + $0x8] sm:$0xff] %v193
  %198 = vst [vmem:[%s4 + $0x10] sm:$0xff] %v194
  %199 = vst [vmem:[%s4 + $0x18] sm:$0xff] %v195
  // Predicated region
  $region18: #{_lambda_.21} parent=0 // pred_check
    _
  $region19: #{_lambda_.21} parent=0 // pred_check_branch
    %201 = sbr.rel (0) target = $region21
  $region20: #{_lambda_.21} parent=0 // pred_region
    _
  $region21: #{_lambda_.21} parent=0 // pred_fallthru
    _
  // Predicated region
  $region22: #{_lambda_.21} parent=0 // pred_check
    _
  $region23: #{_lambda_.21} parent=0 // pred_check_branch
    %203 = sbr.rel (0) target = $region25
  $region24: #{_lambda_.21} parent=0 // pred_region
    _
  $region25: #{_lambda_.21} parent=0 // pred_fallthru
    _

// kernel: _lambda_.22
$region0: #{_lambda_.22}
  #allocation0 [shape = 'u32[]', space=smem, size = 0x4, offset = 0x4, fixed_abs, tag = 'smem constant byte address 0x4 - core index']
  #allocation1 [shape = 'u32[72,128]{1,0:T(1,128)}', space=vmem, size = 0x9000, scoped, tag = 'internal scratch']
  #allocation2 [shape = 'f32[1]{0:T(128)S(6)}', space=smem, size = 0x200, scoped, tag = 'scoped memory for _lambda_.22']
  %s0 = inlined_call_operand.vmem [shape: bf16[288,128], index: 0, kind: input, shape index: {}]
  %s1 = inlined_call_operand.vmem [shape: bf16[32,288], index: 1, kind: input, shape index: {}]
  %s2 = inlined_call_operand.vmem [shape: f32[32,1], index: 2, kind: input, shape index: {}]
  %s3 = inlined_call_operand.<no memory space> [shape: f32[1], index: 3, kind: input, shape index: {}]
  %s4 = inlined_call_operand.vmem [shape: f32[32,128], index: 4, kind: output, shape index: {}]
  %s5 = sld [smem:[#allocation0]]
  $region26: #{_lambda_.22} parent=0
    _
  %s7 = ssub.s32 1, %s5
  %s8 = scalar_select 0, %s7, %s5
  %9 = sst [smem:[#allocation2]] %s3
  // Predicated region
  $region2: #{_lambda_.22} parent=0 // pred_check
    _
  $region3: #{_lambda_.22} parent=0 // pred_check_branch
    %11 = sbr.rel (0) target = $region5
  $region4: #{_lambda_.22} parent=0 // pred_region
    _
  $region5: #{_lambda_.22} parent=0 // pred_fallthru
    _
  // Predicated region
  $region6: #{_lambda_.22} parent=0 // pred_check
    _
  $region7: #{_lambda_.22} parent=0 // pred_check_branch
    %13 = sbr.rel (0) target = $region9
  $region8: #{_lambda_.22} parent=0 // pred_region
    _
  $region9: #{_lambda_.22} parent=0 // pred_fallthru
    _
  // Predicated region
  $region10: #{_lambda_.22} parent=0 // pred_check
    _
  $region11: #{_lambda_.22} parent=0 // pred_check_branch
    %15 = sbr.rel (0) target = $region13
  $region12: #{_lambda_.22} parent=0 // pred_region
    _
  $region13: #{_lambda_.22} parent=0 // pred_fallthru
    _
  // Predicated region
  $region14: #{_lambda_.22} parent=0 // pred_check
    _
  $region15: #{_lambda_.22} parent=0 // pred_check_branch
    %17 = sbr.rel (0) target = $region17
  $region16: #{_lambda_.22} parent=0 // pred_region
    _
  $region17: #{_lambda_.22} parent=0 // pred_fallthru
    _
  %v19 = vld [vmem:[%s1] sm:$0xff]
  %v20 = vld [vmem:[%s1 + $0x8] sm:$0xf]
  %v21 = vld [vmem:[%s1 + $0xc] sm:$0xff]
  %v22 = vld [vmem:[%s1 + $0x14] sm:$0xf]
  %v23 = vld [vmem:[%s1 + $0x18] sm:$0xff]
  %v24 = vld [vmem:[%s1 + $0x20] sm:$0xf]
  %v25 = vld [vmem:[%s1 + $0x24] sm:$0xff]
  %v26 = vld [vmem:[%s1 + $0x2c] sm:$0xf]
  %v27 = vld [vmem:[%s0] sm:$0xf]
  %v28 = vld [vmem:[%s0 + $0x4] sm:$0xf]
  %v29 = vld [vmem:[%s0 + $0x8] sm:$0xf]
  %v30 = vld [vmem:[%s0 + $0xc] sm:$0xf]
  %v31 = vld [vmem:[%s0 + $0x10] sm:$0xf]
  %v32 = vld [vmem:[%s0 + $0x14] sm:$0xf]
  %v33 = vld [vmem:[%s0 + $0x18] sm:$0xf]
  %v34 = vld [vmem:[%s0 + $0x1c] sm:$0xf]
  %v35 = vld [vmem:[%s0 + $0x20] sm:$0xf]
  %v36 = vld [vmem:[%s0 + $0x24] sm:$0xf]
  %v37 = vld [vmem:[%s0 + $0x28] sm:$0xf]
  %v38 = vld [vmem:[%s0 + $0x2c] sm:$0xf]
  %v39 = vld [vmem:[%s0 + $0x30] sm:$0xf]
  %v40 = vld [vmem:[%s0 + $0x34] sm:$0xf]
  %v41 = vld [vmem:[%s0 + $0x38] sm:$0xf]
  %v42 = vld [vmem:[%s0 + $0x3c] sm:$0xf]
  %v43 = vld [vmem:[%s0 + $0x40] sm:$0xf]
  %v44 = vld [vmem:[%s0 + $0x44] sm:$0xf]
  %v45 = vld [vmem:[%s0 + $0x48] sm:$0xf]
  %v46 = vld [vmem:[%s0 + $0x4c] sm:$0xf]
  %v47 = vld [vmem:[%s0 + $0x50] sm:$0xf]
  %v48 = vld [vmem:[%s0 + $0x54] sm:$0xf]
  %v49 = vld [vmem:[%s0 + $0x58] sm:$0xf]
  %v50 = vld [vmem:[%s0 + $0x5c] sm:$0xf]
  %v51 = vld [vmem:[%s0 + $0x60] sm:$0xf]
  %v52 = vld [vmem:[%s0 + $0x64] sm:$0xf]
  %v53 = vld [vmem:[%s0 + $0x68] sm:$0xf]
  %v54 = vld [vmem:[%s0 + $0x6c] sm:$0xf]
  %v55 = vld [vmem:[%s0 + $0x70] sm:$0xf]
  %v56 = vld [vmem:[%s0 + $0x74] sm:$0xf]
  %v57 = vld [vmem:[%s0 + $0x78] sm:$0xf]
  %v58 = vld [vmem:[%s0 + $0x7c] sm:$0xf]
  %v59 = vld [vmem:[%s0 + $0x80] sm:$0xf]
  %v60 = vld [vmem:[%s0 + $0x84] sm:$0xf]
  %v61 = vld [vmem:[%s0 + $0x88] sm:$0xf]
  %v62 = vld [vmem:[%s0 + $0x8c] sm:$0xf]
  %v63 = vld [vmem:[%s2] sm:$0xff]
  %v64 = vld [vmem:[%s2 + $0x8] sm:$0xff]
  %v65 = vld [vmem:[%s2 + $0x10] sm:$0xff]
  %v66 = vld [vmem:[%s2 + $0x18] sm:$0xff]
  %68 = vset.pattern.permute.xlu0 0
  %69 = vperm.xlu0 %68, %v63
  %v70 = vpop.permute.xlu0 %69
  %73 = vset.pattern.permute.xlu0 0
  %74 = vperm.xlu0 %73, %v64
  %v75 = vpop.permute.xlu0 %74
  %78 = vset.pattern.permute.xlu0 0
  %79 = vperm.xlu0 %78, %v65
  %v80 = vpop.permute.xlu0 %79
  %83 = vset.pattern.permute.xlu0 0
  %84 = vperm.xlu0 %83, %v66
  %v85 = vpop.permute.xlu0 %84
  %v95 = vunpack.c.l.b16 %v19
  %v96 = vunpack.c.h.b16 %v19
  %v97 = vunpack.c.l.b16 %v20
  %v98 = vunpack.c.l.b16 %v21
  %v99 = vunpack.c.h.b16 %v21
  %v100 = vunpack.c.l.b16 %v22
  %v101 = vunpack.c.l.b16 %v23
  %v102 = vunpack.c.h.b16 %v23
  %v103 = vunpack.c.l.b16 %v24
  %v104 = vunpack.c.l.b16 %v25
  %v105 = vunpack.c.h.b16 %v25
  %v106 = vunpack.c.l.b16 %v26
  %v107 = vpack.c.b16 %v98, %v95
  %v108 = vpack.c.b16 %v99, %v96
  %v109 = vpack.c.b16 %v100, %v97
  %v110 = vpack.c.b16 %v104, %v101
  %v111 = vpack.c.b16 %v105, %v102
  %v112 = vpack.c.b16 %v106, %v103
  %v153 = vunpack.c.l.b16 %v27
  %v154 = vunpack.c.l.b16 %v28
  %v155 = vunpack.c.l.b16 %v29
  %v156 = vunpack.c.l.b16 %v30
  %v157 = vunpack.c.l.b16 %v31
  %v158 = vunpack.c.l.b16 %v32
  %v159 = vunpack.c.l.b16 %v33
  %v160 = vunpack.c.l.b16 %v34
  %v161 = vunpack.c.l.b16 %v35
  %v162 = vunpack.c.l.b16 %v36
  %v163 = vunpack.c.l.b16 %v37
  %v164 = vunpack.c.l.b16 %v38
  %v165 = vunpack.c.l.b16 %v39
  %v166 = vunpack.c.l.b16 %v40
  %v167 = vunpack.c.l.b16 %v41
  %v168 = vunpack.c.l.b16 %v42
  %v169 = vunpack.c.l.b16 %v43
  %v170 = vunpack.c.l.b16 %v44
  %v171 = vunpack.c.l.b16 %v45
  %v172 = vunpack.c.l.b16 %v46
  %v173 = vunpack.c.l.b16 %v47
  %v174 = vunpack.c.l.b16 %v48
  %v175 = vunpack.c.l.b16 %v49
  %v176 = vunpack.c.l.b16 %v50
  %v177 = vunpack.c.l.b16 %v51
  %v178 = vunpack.c.l.b16 %v52
  %v179 = vunpack.c.l.b16 %v53
  %v180 = vunpack.c.l.b16 %v54
  %v181 = vunpack.c.l.b16 %v55
  %v182 = vunpack.c.l.b16 %v56
  %v183 = vunpack.c.l.b16 %v57
  %v184 = vunpack.c.l.b16 %v58
  %v185 = vunpack.c.l.b16 %v59
  %v186 = vunpack.c.l.b16 %v60
  %v187 = vunpack.c.l.b16 %v61
  %v188 = vunpack.c.l.b16 %v62
  %v189 = vpack.c.b16 %v154, %v153
  %v190 = vpack.c.b16 %v156, %v155
  %v191 = vpack.c.b16 %v158, %v157
  %v192 = vpack.c.b16 %v160, %v159
  %v193 = vpack.c.b16 %v162, %v161
  %v194 = vpack.c.b16 %v164, %v163
  %v195 = vpack.c.b16 %v166, %v165
  %v196 = vpack.c.b16 %v168, %v167
  %v197 = vpack.c.b16 %v170, %v169
  %v198 = vpack.c.b16 %v172, %v171
  %v199 = vpack.c.b16 %v174, %v173
  %v200 = vpack.c.b16 %v176, %v175
  %v201 = vpack.c.b16 %v178, %v177
  %v202 = vpack.c.b16 %v180, %v179
  %v203 = vpack.c.b16 %v182, %v181
  %v204 = vpack.c.b16 %v184, %v183
  %v205 = vpack.c.b16 %v186, %v185
  %v206 = vpack.c.b16 %v188, %v187
  %vm225 = vcmask 261120
  %v227 = vsel %vm225, %v109, 0
  %v230 = vsel %vm225, %v112, 0
  %232 = vmatpush.bf16.msra.mxu0 %v196
  %233 = vmatpush.bf16.msra.mxu0 %v195
  %234 = vmatpush.bf16.msra.mxu0 %v194
  %235 = vmatpush.bf16.msra.mxu0 %v193
  %236 = vmatpush.bf16.msra.mxu0 %v192
  %237 = vmatpush.bf16.msra.mxu0 %v191
  %238 = vmatpush.bf16.msra.mxu0 %v190
  %239 = vmatpush.bf16.msra.mxu0 %v189
  %240 = vmatmul.bf16.gmra.mxu0 %v107
  %v241 = vpop.f32.mrf.mxu0
  %v242 = vadd.f32 %v70, %v241
  %v243 = vpop.f32.mrf.mxu0
  %v244 = vadd.f32 %v75, %v243
  %245 = vmatmul.bf16.gmra.mxu0 %v110
  %v246 = vpop.f32.mrf.mxu0
  %v247 = vadd.f32 %v80, %v246
  %v248 = vpop.f32.mrf.mxu0
  %v249 = vadd.f32 %v85, %v248
  %250 = vdwg.mxu0
  %251 = vmatpush.bf16.msra.mxu0 %v204
  %252 = vmatpush.bf16.msra.mxu0 %v203
  %253 = vmatpush.bf16.msra.mxu0 %v202
  %254 = vmatpush.bf16.msra.mxu0 %v201
  %255 = vmatpush.bf16.msra.mxu0 %v200
  %256 = vmatpush.bf16.msra.mxu0 %v199
  %257 = vmatpush.bf16.msra.mxu0 %v198
  %258 = vmatpush.bf16.msra.mxu0 %v197
  %259 = vmatmul.bf16.gmra.mxu0 %v108
  %v260 = vpop.f32.mrf.mxu0
  %v261 = vadd.f32 %v242, %v260
  %v262 = vpop.f32.mrf.mxu0
  %v263 = vadd.f32 %v244, %v262
  %264 = vmatmul.bf16.gmra.mxu0 %v111
  %v265 = vpop.f32.mrf.mxu0
  %v266 = vadd.f32 %v247, %v265
  %v267 = vpop.f32.mrf.mxu0
  %v268 = vadd.f32 %v249, %v267
  %269 = vdwg.mxu0
  %270 = vmatpush.bf16.msra.mxu0 0
  %271 = vmatpush.bf16.msra.mxu0 0
  %272 = vmatpush.bf16.msra.mxu0 0
  %273 = vmatpush.bf16.msra.mxu0 0
  %274 = vmatpush.bf16.msra.mxu0 0
  %275 = vmatpush.bf16.msra.mxu0 0
  %276 = vmatpush.bf16.msra.mxu0 %v206
  %277 = vmatpush.bf16.msra.mxu0 %v205
  %278 = vmatmul.bf16.gmra.mxu0 %v227
  %v279 = vpop.f32.mrf.mxu0
  %v280 = vadd.f32 %v261, %v279
  %v281 = vpop.f32.mrf.mxu0
  %v282 = vadd.f32 %v263, %v281
  %283 = vmatmul.bf16.gmra.mxu0 %v230
  %v284 = vpop.f32.mrf.mxu0
  %v285 = vadd.f32 %v266, %v284
  %v286 = vpop.f32.mrf.mxu0
  %v287 = vadd.f32 %v268, %v286
  %288 = vdwg.mxu0
  %s289 = sld [smem:[#allocation2]]
  %vm290 = vcmp.ge.f32.partialorder %v280, 0.0
  %vm291 = vcmp.ge.f32.partialorder %v282, 0.0
  %vm292 = vcmp.ge.f32.partialorder %v285, 0.0
  %vm293 = vcmp.ge.f32.partialorder %v287, 0.0
  %v294 = vstv %s289
  %v295 = vmul.f32 %v294, %v280
  %v296 = vmul.f32 %v294, %v282
  %v297 = vmul.f32 %v294, %v285
  %v298 = vmul.f32 %v294, %v287
  %v299 = vsel %vm290, %v280, %v295
  %v300 = vsel %vm291, %v282, %v296
  %v301 = vsel %vm292, %v285, %v297
  %v302 = vsel %vm293, %v287, %v298
  %303 = vst [vmem:[%s4] sm:$0xff] %v299
  %304 = vst [vmem:[%s4 + $0x8] sm:$0xff] %v300
  %305 = vst [vmem:[%s4 + $0x10] sm:$0xff] %v301
  %306 = vst [vmem:[%s4 + $0x18] sm:$0xff] %v302
  // Predicated region
  $region18: #{_lambda_.22} parent=0 // pred_check
    _
  $region19: #{_lambda_.22} parent=0 // pred_check_branch
    %308 = sbr.rel (0) target = $region21
  $region20: #{_lambda_.22} parent=0 // pred_region
    _
  $region21: #{_lambda_.22} parent=0 // pred_fallthru
    _
  // Predicated region
  $region22: #{_lambda_.22} parent=0 // pred_check
    _
  $region23: #{_lambda_.22} parent=0 // pred_check_branch
    %310 = sbr.rel (0) target = $region25
  $region24: #{_lambda_.22} parent=0 // pred_region
    _
  $region25: #{_lambda_.22} parent=0 // pred_fallthru
    _

// kernel: _lambda_.23
$region0: #{_lambda_.23}
  #allocation0 [shape = 'u32[]', space=smem, size = 0x4, offset = 0x4, fixed_abs, tag = 'smem constant byte address 0x4 - core index']
  #allocation1 [shape = 'u32[72,128]{1,0:T(1,128)}', space=vmem, size = 0x9000, scoped, tag = 'internal scratch']
  #allocation2 [shape = 'f32[1]{0:T(128)S(6)}', space=smem, size = 0x200, scoped, tag = 'scoped memory for _lambda_.23']
  %s0 = inlined_call_operand.vmem [shape: bf16[288,128], index: 0, kind: input, shape index: {}]
  %s1 = inlined_call_operand.vmem [shape: bf16[32,288], index: 1, kind: input, shape index: {}]
  %s2 = inlined_call_operand.vmem [shape: f32[32,1], index: 2, kind: input, shape index: {}]
  %s3 = inlined_call_operand.<no memory space> [shape: f32[1], index: 3, kind: input, shape index: {}]
  %s4 = inlined_call_operand.vmem [shape: f32[32,128], index: 4, kind: input, shape index: {}]
  %s5 = inlined_call_operand.vmem [shape: f32[32,128], index: 5, kind: output, shape index: {0}]
  %s6 = inlined_call_operand.vmem [shape: f32[32,128], index: 6, kind: output, shape index: {1}]
  %7 = xla_tuple %s5, %s6
  %s8 = sld [smem:[#allocation0]]
  $region38: #{_lambda_.23} parent=0
    _
  %s10 = ssub.s32 1, %s8
  %s11 = scalar_select 0, %s10, %s8
  %12 = sst [smem:[#allocation2]] %s3
  // Predicated region
  $region2: #{_lambda_.23} parent=0 // pred_check
    _
  $region3: #{_lambda_.23} parent=0 // pred_check_branch
    %14 = sbr.rel (0) target = $region5
  $region4: #{_lambda_.23} parent=0 // pred_region
    _
  $region5: #{_lambda_.23} parent=0 // pred_fallthru
    _
  // Predicated region
  $region6: #{_lambda_.23} parent=0 // pred_check
    _
  $region7: #{_lambda_.23} parent=0 // pred_check_branch
    %16 = sbr.rel (0) target = $region9
  $region8: #{_lambda_.23} parent=0 // pred_region
    _
  $region9: #{_lambda_.23} parent=0 // pred_fallthru
    _
  // Predicated region
  $region10: #{_lambda_.23} parent=0 // pred_check
    _
  $region11: #{_lambda_.23} parent=0 // pred_check_branch
    %18 = sbr.rel (0) target = $region13
  $region12: #{_lambda_.23} parent=0 // pred_region
    _
  $region13: #{_lambda_.23} parent=0 // pred_fallthru
    _
  // Predicated region
  $region14: #{_lambda_.23} parent=0 // pred_check
    _
  $region15: #{_lambda_.23} parent=0 // pred_check_branch
    %20 = sbr.rel (0) target = $region17
  $region16: #{_lambda_.23} parent=0 // pred_region
    _
  $region17: #{_lambda_.23} parent=0 // pred_fallthru
    _
  // Predicated region
  $region18: #{_lambda_.23} parent=0 // pred_check
    _
  $region19: #{_lambda_.23} parent=0 // pred_check_branch
    %22 = sbr.rel (0) target = $region21
  $region20: #{_lambda_.23} parent=0 // pred_region
    _
  $region21: #{_lambda_.23} parent=0 // pred_fallthru
    _
  %v24 = vld [vmem:[%s1] sm:$0xff]
  %v25 = vld [vmem:[%s1 + $0x8] sm:$0xf]
  %v26 = vld [vmem:[%s1 + $0xc] sm:$0xff]
  %v27 = vld [vmem:[%s1 + $0x14] sm:$0xf]
  %v28 = vld [vmem:[%s1 + $0x18] sm:$0xff]
  %v29 = vld [vmem:[%s1 + $0x20] sm:$0xf]
  %v30 = vld [vmem:[%s1 + $0x24] sm:$0xff]
  %v31 = vld [vmem:[%s1 + $0x2c] sm:$0xf]
  %v32 = vld [vmem:[%s0] sm:$0xf]
  %v33 = vld [vmem:[%s0 + $0x4] sm:$0xf]
  %v34 = vld [vmem:[%s0 + $0x8] sm:$0xf]
  %v35 = vld [vmem:[%s0 + $0xc] sm:$0xf]
  %v36 = vld [vmem:[%s0 + $0x10] sm:$0xf]
  %v37 = vld [vmem:[%s0 + $0x14] sm:$0xf]
  %v38 = vld [vmem:[%s0 + $0x18] sm:$0xf]
  %v39 = vld [vmem:[%s0 + $0x1c] sm:$0xf]
  %v40 = vld [vmem:[%s0 + $0x20] sm:$0xf]
  %v41 = vld [vmem:[%s0 + $0x24] sm:$0xf]
  %v42 = vld [vmem:[%s0 + $0x28] sm:$0xf]
  %v43 = vld [vmem:[%s0 + $0x2c] sm:$0xf]
  %v44 = vld [vmem:[%s0 + $0x30] sm:$0xf]
  %v45 = vld [vmem:[%s0 + $0x34] sm:$0xf]
  %v46 = vld [vmem:[%s0 + $0x38] sm:$0xf]
  %v47 = vld [vmem:[%s0 + $0x3c] sm:$0xf]
  %v48 = vld [vmem:[%s0 + $0x40] sm:$0xf]
  %v49 = vld [vmem:[%s0 + $0x44] sm:$0xf]
  %v50 = vld [vmem:[%s0 + $0x48] sm:$0xf]
  %v51 = vld [vmem:[%s0 + $0x4c] sm:$0xf]
  %v52 = vld [vmem:[%s0 + $0x50] sm:$0xf]
  %v53 = vld [vmem:[%s0 + $0x54] sm:$0xf]
  %v54 = vld [vmem:[%s0 + $0x58] sm:$0xf]
  %v55 = vld [vmem:[%s0 + $0x5c] sm:$0xf]
  %v56 = vld [vmem:[%s0 + $0x60] sm:$0xf]
  %v57 = vld [vmem:[%s0 + $0x64] sm:$0xf]
  %v58 = vld [vmem:[%s0 + $0x68] sm:$0xf]
  %v59 = vld [vmem:[%s0 + $0x6c] sm:$0xf]
  %v60 = vld [vmem:[%s0 + $0x70] sm:$0xf]
  %v61 = vld [vmem:[%s0 + $0x74] sm:$0xf]
  %v62 = vld [vmem:[%s0 + $0x78] sm:$0xf]
  %v63 = vld [vmem:[%s0 + $0x7c] sm:$0xf]
  %v64 = vld [vmem:[%s0 + $0x80] sm:$0xf]
  %v65 = vld [vmem:[%s0 + $0x84] sm:$0xf]
  %v66 = vld [vmem:[%s0 + $0x88] sm:$0xf]
  %v67 = vld [vmem:[%s0 + $0x8c] sm:$0xf]
  %v68 = vld [vmem:[%s2] sm:$0xff]
  %v69 = vld [vmem:[%s2 + $0x8] sm:$0xff]
  %v70 = vld [vmem:[%s2 + $0x10] sm:$0xff]
  %v71 = vld [vmem:[%s2 + $0x18] sm:$0xff]
  %73 = vset.pattern.permute.xlu0 0
  %74 = vperm.xlu0 %73, %v68
  %v75 = vpop.permute.xlu0 %74
  %78 = vset.pattern.permute.xlu0 0
  %79 = vperm.xlu0 %78, %v69
  %v80 = vpop.permute.xlu0 %79
  %83 = vset.pattern.permute.xlu0 0
  %84 = vperm.xlu0 %83, %v70
  %v85 = vpop.permute.xlu0 %84
  %88 = vset.pattern.permute.xlu0 0
  %89 = vperm.xlu0 %88, %v71
  %v90 = vpop.permute.xlu0 %89
  %v100 = vunpack.c.l.b16 %v24
  %v101 = vunpack.c.h.b16 %v24
  %v102 = vunpack.c.l.b16 %v25
  %v103 = vunpack.c.l.b16 %v26
  %v104 = vunpack.c.h.b16 %v26
  %v105 = vunpack.c.l.b16 %v27
  %v106 = vunpack.c.l.b16 %v28
  %v107 = vunpack.c.h.b16 %v28
  %v108 = vunpack.c.l.b16 %v29
  %v109 = vunpack.c.l.b16 %v30
  %v110 = vunpack.c.h.b16 %v30
  %v111 = vunpack.c.l.b16 %v31
  %v112 = vpack.c.b16 %v103, %v100
  %v113 = vpack.c.b16 %v104, %v101
  %v114 = vpack.c.b16 %v105, %v102
  %v115 = vpack.c.b16 %v109, %v106
  %v116 = vpack.c.b16 %v110, %v107
  %v117 = vpack.c.b16 %v111, %v108
  %v158 = vunpack.c.l.b16 %v32
  %v159 = vunpack.c.l.b16 %v33
  %v160 = vunpack.c.l.b16 %v34
  %v161 = vunpack.c.l.b16 %v35
  %v162 = vunpack.c.l.b16 %v36
  %v163 = vunpack.c.l.b16 %v37
  %v164 = vunpack.c.l.b16 %v38
  %v165 = vunpack.c.l.b16 %v39
  %v166 = vunpack.c.l.b16 %v40
  %v167 = vunpack.c.l.b16 %v41
  %v168 = vunpack.c.l.b16 %v42
  %v169 = vunpack.c.l.b16 %v43
  %v170 = vunpack.c.l.b16 %v44
  %v171 = vunpack.c.l.b16 %v45
  %v172 = vunpack.c.l.b16 %v46
  %v173 = vunpack.c.l.b16 %v47
  %v174 = vunpack.c.l.b16 %v48
  %v175 = vunpack.c.l.b16 %v49
  %v176 = vunpack.c.l.b16 %v50
  %v177 = vunpack.c.l.b16 %v51
  %v178 = vunpack.c.l.b16 %v52
  %v179 = vunpack.c.l.b16 %v53
  %v180 = vunpack.c.l.b16 %v54
  %v181 = vunpack.c.l.b16 %v55
  %v182 = vunpack.c.l.b16 %v56
  %v183 = vunpack.c.l.b16 %v57
  %v184 = vunpack.c.l.b16 %v58
  %v185 = vunpack.c.l.b16 %v59
  %v186 = vunpack.c.l.b16 %v60
  %v187 = vunpack.c.l.b16 %v61
  %v188 = vunpack.c.l.b16 %v62
  %v189 = vunpack.c.l.b16 %v63
  %v190 = vunpack.c.l.b16 %v64
  %v191 = vunpack.c.l.b16 %v65
  %v192 = vunpack.c.l.b16 %v66
  %v193 = vunpack.c.l.b16 %v67
  %v194 = vpack.c.b16 %v159, %v158
  %v195 = vpack.c.b16 %v161, %v160
  %v196 = vpack.c.b16 %v163, %v162
  %v197 = vpack.c.b16 %v165, %v164
  %v198 = vpack.c.b16 %v167, %v166
  %v199 = vpack.c.b16 %v169, %v168
  %v200 = vpack.c.b16 %v171, %v170
  %v201 = vpack.c.b16 %v173, %v172
  %v202 = vpack.c.b16 %v175, %v174
  %v203 = vpack.c.b16 %v177, %v176
  %v204 = vpack.c.b16 %v179, %v178
  %v205 = vpack.c.b16 %v181, %v180
  %v206 = vpack.c.b16 %v183, %v182
  %v207 = vpack.c.b16 %v185, %v184
  %v208 = vpack.c.b16 %v187, %v186
  %v209 = vpack.c.b16 %v189, %v188
  %v210 = vpack.c.b16 %v191, %v190
  %v211 = vpack.c.b16 %v193, %v192
  %vm230 = vcmask 261120
  %v232 = vsel %vm230, %v114, 0
  %v235 = vsel %vm230, %v117, 0
  %237 = vmatpush.bf16.msra.mxu0 %v201
  %238 = vmatpush.bf16.msra.mxu0 %v200
  %239 = vmatpush.bf16.msra.mxu0 %v199
  %240 = vmatpush.bf16.msra.mxu0 %v198
  %241 = vmatpush.bf16.msra.mxu0 %v197
  %242 = vmatpush.bf16.msra.mxu0 %v196
  %243 = vmatpush.bf16.msra.mxu0 %v195
  %244 = vmatpush.bf16.msra.mxu0 %v194
  %245 = vmatmul.bf16.gmra.mxu0 %v112
  %v246 = vpop.f32.mrf.mxu0
  %v247 = vadd.f32 %v75, %v246
  %v248 = vpop.f32.mrf.mxu0
  %v249 = vadd.f32 %v80, %v248
  %250 = vmatmul.bf16.gmra.mxu0 %v115
  %v251 = vpop.f32.mrf.mxu0
  %v252 = vadd.f32 %v85, %v251
  %v253 = vpop.f32.mrf.mxu0
  %v254 = vadd.f32 %v90, %v253
  %255 = vdwg.mxu0
  %256 = vmatpush.bf16.msra.mxu0 %v209
  %257 = vmatpush.bf16.msra.mxu0 %v208
  %258 = vmatpush.bf16.msra.mxu0 %v207
  %259 = vmatpush.bf16.msra.mxu0 %v206
  %260 = vmatpush.bf16.msra.mxu0 %v205
  %261 = vmatpush.bf16.msra.mxu0 %v204
  %262 = vmatpush.bf16.msra.mxu0 %v203
  %263 = vmatpush.bf16.msra.mxu0 %v202
  %264 = vmatmul.bf16.gmra.mxu0 %v113
  %v265 = vpop.f32.mrf.mxu0
  %v266 = vadd.f32 %v247, %v265
  %v267 = vpop.f32.mrf.mxu0
  %v268 = vadd.f32 %v249, %v267
  %269 = vmatmul.bf16.gmra.mxu0 %v116
  %v270 = vpop.f32.mrf.mxu0
  %v271 = vadd.f32 %v252, %v270
  %v272 = vpop.f32.mrf.mxu0
  %v273 = vadd.f32 %v254, %v272
  %274 = vdwg.mxu0
  %275 = vmatpush.bf16.msra.mxu0 0
  %276 = vmatpush.bf16.msra.mxu0 0
  %277 = vmatpush.bf16.msra.mxu0 0
  %278 = vmatpush.bf16.msra.mxu0 0
  %279 = vmatpush.bf16.msra.mxu0 0
  %280 = vmatpush.bf16.msra.mxu0 0
  %281 = vmatpush.bf16.msra.mxu0 %v211
  %282 = vmatpush.bf16.msra.mxu0 %v210
  %283 = vmatmul.bf16.gmra.mxu0 %v232
  %v284 = vpop.f32.mrf.mxu0
  %v285 = vadd.f32 %v266, %v284
  %v286 = vpop.f32.mrf.mxu0
  %v287 = vadd.f32 %v268, %v286
  %288 = vmatmul.bf16.gmra.mxu0 %v235
  %v289 = vpop.f32.mrf.mxu0
  %v290 = vadd.f32 %v271, %v289
  %v291 = vpop.f32.mrf.mxu0
  %v292 = vadd.f32 %v273, %v291
  %293 = vdwg.mxu0
  %s294 = sld [smem:[#allocation2]]
  %vm295 = vcmp.ge.f32.partialorder %v285, 0.0
  %vm296 = vcmp.ge.f32.partialorder %v287, 0.0
  %vm297 = vcmp.ge.f32.partialorder %v290, 0.0
  %vm298 = vcmp.ge.f32.partialorder %v292, 0.0
  %v299 = vstv %s294
  %v300 = vmul.f32 %v299, %v285
  %v301 = vmul.f32 %v299, %v287
  %v302 = vmul.f32 %v299, %v290
  %v303 = vmul.f32 %v299, %v292
  %v304 = vsel %vm295, %v285, %v300
  %v305 = vsel %vm296, %v287, %v301
  %v306 = vsel %vm297, %v290, %v302
  %v307 = vsel %vm298, %v292, %v303
  %308 = vst [vmem:[%s5] sm:$0xff] %v304
  %309 = vst [vmem:[%s5 + $0x8] sm:$0xff] %v305
  %310 = vst [vmem:[%s5 + $0x10] sm:$0xff] %v306
  %311 = vst [vmem:[%s5 + $0x18] sm:$0xff] %v307
  %v312 = vld [vmem:[%s4] sm:$0xff]
  %v313 = vld [vmem:[%s4 + $0x8] sm:$0xff]
  %v314 = vld [vmem:[%s4 + $0x10] sm:$0xff]
  %v315 = vld [vmem:[%s4 + $0x18] sm:$0xff]
  %v316 = vadd.f32 %v304, %v312
  %v317 = vadd.f32 %v305, %v313
  %v318 = vadd.f32 %v306, %v314
  %v319 = vadd.f32 %v307, %v315
  %320 = vst [vmem:[%s6] sm:$0xff] %v316
  %321 = vst [vmem:[%s6 + $0x8] sm:$0xff] %v317
  %322 = vst [vmem:[%s6 + $0x10] sm:$0xff] %v318
  %323 = vst [vmem:[%s6 + $0x18] sm:$0xff] %v319
  // Predicated region
  $region22: #{_lambda_.23} parent=0 // pred_check
    _
  $region23: #{_lambda_.23} parent=0 // pred_check_branch
    %325 = sbr.rel (0) target = $region25
  $region24: #{_lambda_.23} parent=0 // pred_region
    _
  $region25: #{_lambda_.23} parent=0 // pred_fallthru
    _
  // Predicated region
  $region26: #{_lambda_.23} parent=0 // pred_check
    _
  $region27: #{_lambda_.23} parent=0 // pred_check_branch
    %327 = sbr.rel (0) target = $region29
  $region28: #{_lambda_.23} parent=0 // pred_region
    _
  $region29: #{_lambda_.23} parent=0 // pred_fallthru
    _
  // Predicated region
  $region30: #{_lambda_.23} parent=0 // pred_check
    _
  $region31: #{_lambda_.23} parent=0 // pred_check_branch
    %329 = sbr.rel (0) target = $region33
  $region32: #{_lambda_.23} parent=0 // pred_region
    _
  $region33: #{_lambda_.23} parent=0 // pred_fallthru
    _
  // Predicated region
  $region34: #{_lambda_.23} parent=0 // pred_check
    _
  $region35: #{_lambda_.23} parent=0 // pred_check_branch
    %331 = sbr.rel (0) target = $region37
  $region36: #{_lambda_.23} parent=0 // pred_region
    _
  $region37: #{_lambda_.23} parent=0 // pred_fallthru
    _

</llo_original>
